<compile_context>
chip_gen: v7x
topology: tpu7x:2x2x1
jax: 0.10.0
libtpu: 0.0.40
codegen_flags: <defaults>
</compile_context>

<pallas_src>
import functools

import jax
import jax.numpy as jnp
from jax import lax
from jax.experimental import pallas as pl
from jax.experimental.pallas import tpu as pltpu

EPS = 1e-5
LANES = 128
SUBLANES = 8
MIB = 1024 * 1024


def _round_up(x, m):
    return (x + m - 1) // m * m


# ---------------------------------------------------------------------------
# Kernel 1: conv-as-GEMM with K-reduction axis + fused partial BN statistics
# ---------------------------------------------------------------------------
def conv_gemm_stats_kernel(p_ref, w_ref, o_ref, stats_ref, acc_ref):
    # p_ref: (tm, tk)  w_ref: (tk, tn)
    # o_ref: (tm, tn)  stats_ref: (1, 2, tn)  acc_ref: (tm, tn) f32
    k = pl.program_id(2)

    @pl.when(k == 0)
    def _():
        acc_ref[...] = jnp.zeros_like(acc_ref)

    acc_ref[...] += jnp.dot(p_ref[...], w_ref[...],
                            preferred_element_type=jnp.float32)

    @pl.when(k == pl.num_programs(2) - 1)
    def _():
        acc = acc_ref[...]
        o_ref[...] = acc
        s = jnp.sum(acc, axis=0, keepdims=True)          # (1, tn)
        sq = jnp.sum(acc * acc, axis=0, keepdims=True)   # (1, tn)
        stats_ref[0] = jnp.concatenate([s, sq], axis=0)  # (2, tn)


def conv_gemm_with_stats(patches, w_mat, *, tm, tn, tk):
    Mp, Kp = patches.shape
    _, Cp = w_mat.shape
    nm, nn, nk = Mp // tm, Cp // tn, Kp // tk

    itm = patches.dtype.itemsize
    est_bytes = (2 * (tm * tk + tk * tn) * itm      # double-buffered GEMM inputs
                 + 2 * tm * tn * 4                  # double-buffered conv output
                 + 2 * 2 * tn * 4                   # stats output
                 + tm * tn * 4)                     # accumulator scratch
    vmem_limit = int(min(64 * MIB, max(32 * MIB, est_bytes + 8 * MIB)))

    cost = pl.CostEstimate(
        flops=2 * Mp * Kp * Cp,
        transcendentals=0,
        bytes_accessed=int(nn * Mp * Kp * itm + nm * Kp * Cp * itm
                           + Mp * Cp * 4 + nm * 2 * Cp * 4),
    )

    return pl.pallas_call(
        conv_gemm_stats_kernel,
        out_shape=(
            jax.ShapeDtypeStruct((Mp, Cp), jnp.float32),
            jax.ShapeDtypeStruct((nm, 2, Cp), jnp.float32),
        ),
        grid_spec=pltpu.PrefetchScalarGridSpec(
            num_scalar_prefetch=0,
            grid=(nm, nn, nk),
            in_specs=[
                pl.BlockSpec((tm, tk), lambda i, j, k: (i, k)),
                pl.BlockSpec((tk, tn), lambda i, j, k: (k, j)),
            ],
            out_specs=[
                pl.BlockSpec((tm, tn), lambda i, j, k: (i, j)),
                pl.BlockSpec((1, 2, tn), lambda i, j, k: (i, 0, j)),
            ],
            scratch_shapes=[pltpu.VMEM((tm, tn), jnp.float32)],
        ),
        compiler_params=pltpu.CompilerParams(
            dimension_semantics=("parallel", "parallel", "arbitrary"),
            vmem_limit_bytes=vmem_limit,
        ),
        cost_estimate=cost,
    )(patches, w_mat)


# ---------------------------------------------------------------------------
# Kernel 2: tiled normalize (y*scale + shift) + ReLU, parallel over M tiles
# ---------------------------------------------------------------------------
def bn_relu_kernel(y_ref, scale_ref, shift_ref, o_ref):
    # y_ref: (tm, Cpad)   scale/shift: (1, Cpad)
    o_ref[...] = jnp.maximum(y_ref[...] * scale_ref[...] + shift_ref[...], 0.0)


def bn_relu_apply(y, scale_row, shift_row, *, tm):
    Mp, Cp = y.shape
    nm = Mp // tm
    est_bytes = (2 * tm * Cp + 2 * tm * Cp + 4 * Cp) * 4
    return pl.pallas_call(
        bn_relu_kernel,
        out_shape=jax.ShapeDtypeStruct((Mp, Cp), jnp.float32),
        grid_spec=pltpu.PrefetchScalarGridSpec(
            num_scalar_prefetch=0,
            grid=(nm,),
            in_specs=[
                pl.BlockSpec((tm, Cp), lambda i: (i, 0)),
                pl.BlockSpec((1, Cp), lambda i: (0, 0)),
                pl.BlockSpec((1, Cp), lambda i: (0, 0)),
            ],
            out_specs=pl.BlockSpec((tm, Cp), lambda i: (i, 0)),
        ),
        compiler_params=pltpu.CompilerParams(
            dimension_semantics=("parallel",),
            vmem_limit_bytes=int(min(64 * MIB, max(32 * MIB, est_bytes + 8 * MIB))),
        ),
    )(y, scale_row, shift_row)


# ---------------------------------------------------------------------------
# Tile-selection helpers (static, trace-time Python)
# ---------------------------------------------------------------------------
def _choose_k_tiling(cin, kh, kw, cap=2048):
    """Returns (Cin_padded, Kdim, tk) with tk | Kdim and a legal block shape."""
    cin_p = _round_up(cin, SUBLANES)
    kdim = kh * kw * cin_p
    if kdim <= cap:
        return cin_p, kdim, kdim              # single K step, full-dim block
    # Need tk < Kdim, so tk must be a multiple of 128: pad Cin to 128 instead.
    cin_p = _round_up(cin, LANES)
    kdim = kh * kw * cin_p
    if cin_p <= cap:
        d = 1
        for cand in range(kh * kw, 0, -1):
            if (kh * kw) % cand == 0 and cin_p * cand <= cap:
                d = cand
                break
        return cin_p, kdim, cin_p * d
    # Very large Cin: largest multiple-of-128 divisor of Cin_p below the cap.
    tk = LANES
    for cand in range(cap, LANES - 1, -LANES):
        if cin_p % cand == 0:
            tk = cand
            break
    return cin_p, kdim, tk


def _choose_m_tiling(m):
    """Returns (tm, Mp). Prefers tm | M so the patch matrix needs no M pad."""
    m8 = _round_up(m, SUBLANES)
    if m8 <= 512:
        return m8, m8
    for cand in range(512, 127, -8):
        if m % cand == 0:
            return cand, m
    return 512, _round_up(m, 512)


def _choose_n_tiling(cp):
    if cp <= 512:
        return cp
    for cand in range(512, LANES - 1, -LANES):
        if cp % cand == 0:
            return cand
    return LANES


# ---------------------------------------------------------------------------
# Module wrapper (im2col / padding / reshapes are glue in plain JAX)
# ---------------------------------------------------------------------------
@functools.partial(jax.jit,
                   static_argnames=("stride", "padding", "dilation", "mxu_dtype"))
def conv2d_batchnorm_relu(x_nchw, weight, bias, gamma, beta, *,
                          stride=1, padding=1, dilation=1,
                          mxu_dtype=jnp.float32):
    """x_nchw: (N, Cin, H, W); weight: (Cout, Cin, KH, KW) -- PyTorch layout.

    `bias` is accepted for API parity but intentionally unused: a per-channel
    conv bias is cancelled exactly by the BatchNorm mean subtraction.
    `mxu_dtype=jnp.bfloat16` halves GEMM input traffic on v6e/v7x (f32 accumulate).
    """
    del bias
    N, Cin, H, W = x_nchw.shape
    Cout, _, KH, KW = weight.shape

    Hout = (H + 2 * padding - dilation * (KH - 1) - 1) // stride + 1
    Wout = (W + 2 * padding - dilation * (KW - 1) - 1) // stride + 1
    M = N * Hout * Wout
    Cp = _round_up(Cout, LANES)                       # lane-dense output width

    Cin_p, Kdim, tk = _choose_k_tiling(Cin, KH, KW)
    tm, Mp = _choose_m_tiling(M)
    tn = _choose_n_tiling(Cp)

    # NCHW -> NHWC; pad spatially AND along Cin (K alignment is paid on the
    # small input tensor, never on the KH*KW-times-larger patch matrix).
    x = jnp.transpose(x_nchw, (0, 2, 3, 1)).astype(jnp.float32)
    x_pad = jnp.pad(x, ((0, 0), (padding, padding), (padding, padding),
                        (0, Cin_p - Cin)))

    # TODO(synk): fold the KH*KW window loop into the GEMM grid (read shifted
    # NHWC slabs in-place via index_maps) to avoid the KH*KW-fold HBM
    # inflation of the materialized im2col patch matrix.
    cols = []
    for kh in range(KH):
        for kw in range(KW):
            h0, w0 = kh * dilation, kw * dilation
            cols.append(
                x_pad[:, h0:h0 + stride * Hout:stride,
                      w0:w0 + stride * Wout:stride, :])
    patches = jnp.concatenate(cols, axis=-1).reshape(M, Kdim)
    if Mp != M:
        patches = jnp.pad(patches, ((0, Mp - M), (0, 0)))
    patches = patches.astype(mxu_dtype)

    # weight (Cout, Cin, KH, KW) -> (KH, KW, Cin_p, Cp) -> (Kdim, Cp)
    w = jnp.transpose(weight.astype(jnp.float32), (2, 3, 1, 0))
    w = jnp.pad(w, ((0, 0), (0, 0), (0, Cin_p - Cin), (0, Cp - Cout)))
    w_mat = w.reshape(Kdim, Cp).astype(mxu_dtype)

    conv_out, part_stats = conv_gemm_with_stats(patches, w_mat,
                                                tm=tm, tn=tn, tk=tk)

    # Combine tiny per-tile partial stats (padded rows / channels are all zero
    # because input / weight padding is zero and there is no bias).
    sums = jnp.sum(part_stats[:, 0, :], axis=0)       # (Cp,)
    sumsq = jnp.sum(part_stats[:, 1, :], axis=0)      # (Cp,)
    mean = sums / M
    var = jnp.maximum(sumsq / M - mean * mean, 0.0)   # biased batch variance
    inv = lax.rsqrt(var + EPS)

    gamma_p = jnp.pad(gamma.astype(jnp.float32), (0, Cp - Cout))
    beta_p = jnp.pad(beta.astype(jnp.float32), (0, Cp - Cout))
    scale = (gamma_p * inv).reshape(1, Cp)
    shift = (beta_p - mean * gamma_p * inv).reshape(1, Cp)

    # Pass 2 is purely memory-bound: grow the row tile when it still divides Mp
    # and stays well inside VMEM (fewer per-grid-step overheads).
    tm2 = tm
    for mult in (8, 4, 2):
        cand = tm * mult
        if cand <= 4096 and Mp % cand == 0 and 4 * cand * Cp * 4 <= 24 * MIB:
            tm2 = cand
            break

    out = bn_relu_apply(conv_out, scale, shift, tm=tm2)  # (Mp, Cp)

    # Slice padding off, (M, Cout) -> NHWC -> NCHW.
    out = out[:M, :Cout].reshape(N, Hout, Wout, Cout)
    return jnp.transpose(out, (0, 3, 1, 2))


# ---------------------------------------------------------------------------
# Pure-JAX reference (matches the PyTorch forward in training mode, with bias)
# ---------------------------------------------------------------------------
def reference(x_nchw, weight, bias, gamma, beta, *, stride=1, padding=1):
    conv = lax.conv_general_dilated(
        x_nchw.astype(jnp.float32), weight.astype(jnp.float32),
        window_strides=(stride, stride),
        padding=((padding, padding), (padding, padding)),
        dimension_numbers=("NCHW", "OIHW", "NCHW"),
    ) + bias.reshape(1, -1, 1, 1)
    mean = conv.mean(axis=(0, 2, 3), keepdims=True)
    var = ((conv - mean) ** 2).mean(axis=(0, 2, 3), keepdims=True)
    norm = (conv - mean) * lax.rsqrt(var + EPS)
    norm = norm * gamma.reshape(1, -1, 1, 1) + beta.reshape(1, -1, 1, 1)
    return jnp.maximum(norm, 0.0)


if __name__ == "__main__":
    # Module hyperparameters (consistent with the PyTorch __init__ signature)
    in_channels, n_filters, k_size, stride, padding = 4, 8, 3, 1, 1
    N, H, W = 2, 16, 16

    key = jax.random.PRNGKey(0)
    kx, kw, kb, kg, kbt = jax.random.split(key, 5)

    x = jax.random.normal(kx, (N, in_channels, H, W), dtype=jnp.float32)
    weight = jax.random.normal(kw, (n_filters, in_channels, k_size, k_size),
                               dtype=jnp.float32) * 0.1
    bias = jax.random.normal(kb, (n_filters,), dtype=jnp.float32) * 0.1
    gamma = 1.0 + 0.1 * jax.random.normal(kg, (n_filters,), dtype=jnp.float32)
    beta = 0.1 * jax.random.normal(kbt, (n_filters,), dtype=jnp.float32)

    out = conv2d_batchnorm_relu(x, weight, bias, gamma, beta,
                                stride=stride, padding=padding)
    out = jax.block_until_ready(out)

    ref = reference(x, weight, bias, gamma, beta, stride=stride, padding=padding)
    assert out.shape == (N, n_filters, H, W)
    assert jnp.allclose(out, ref, atol=1e-4, rtol=1e-4), (
        f"max abs err {jnp.max(jnp.abs(out - ref))}")

    print("KERNEL_OK")
</pallas_src>

<mosaic_0001>
module attributes {stable_mosaic.version = 11 : i64} {
  func.func @conv_gemm_stats_kernel(%arg0: i32, %arg1: i32, %arg2: i32, %arg3: memref<512x72xf32, #tpu.memory_space<vmem>>, %arg4: memref<72x128xf32, #tpu.memory_space<vmem>>, %arg5: memref<512x128xf32, #tpu.memory_space<vmem>>, %arg6: memref<1x2x128xf32, #tpu.memory_space<vmem>>, %arg7: memref<512x128xf32, #tpu.memory_space<vmem>>) attributes {dimension_semantics = [#tpu.dimension_semantics<parallel>, #tpu.dimension_semantics<parallel>, #tpu.dimension_semantics<arbitrary>], iteration_bounds = array<i64: 1, 1, 1>, scalar_prefetch = 0 : i64, scratch_operands = 1 : i64, tpu.core_type = #tpu.core_type<tc>, window_params = [{transform_indices = @transform_0, window_bounds = array<i64: 512, 72>}, {transform_indices = @transform_1, window_bounds = array<i64: 72, 128>}, {transform_indices = @transform_2, window_bounds = array<i64: 512, 128>}, {transform_indices = @transform_3, window_bounds = array<i64: 1, 2, 128>}]} {
    %c0_i32 = arith.constant 0 : i32
    %0 = arith.cmpi eq, %arg2, %c0_i32 : i32
    %1 = arith.extui %0 : i1 to i32
    %c0_i32_0 = arith.constant 0 : i32
    %2 = arith.cmpi ne, %1, %c0_i32_0 : i32
    scf.if %2 {
      %cst_10 = arith.constant 0.000000e+00 : f32
      %12 = vector.broadcast %cst_10 : f32 to vector<512x128xf32>
      %c0_11 = arith.constant 0 : index
      %c0_12 = arith.constant 0 : index
      %13 = vector.load %arg7[%c0_11, %c0_12] : memref<512x128xf32, #tpu.memory_space<vmem>>, vector<512x128xf32>
      tpu.vector_store %arg7[%c0_11, %c0_12], %12 {strides = array<i32>} : memref<512x128xf32, #tpu.memory_space<vmem>>, vector<512x128xf32>,
    } else {
    }
    %c0 = arith.constant 0 : index
    %c0_1 = arith.constant 0 : index
    %3 = vector.load %arg7[%c0, %c0_1] : memref<512x128xf32, #tpu.memory_space<vmem>>, vector<512x128xf32>
    %c0_2 = arith.constant 0 : index
    %c0_3 = arith.constant 0 : index
    %4 = vector.load %arg3[%c0_2, %c0_3] : memref<512x72xf32, #tpu.memory_space<vmem>>, vector<512x72xf32>
    %c0_4 = arith.constant 0 : index
    %c0_5 = arith.constant 0 : index
    %5 = vector.load %arg4[%c0_4, %c0_5] : memref<72x128xf32, #tpu.memory_space<vmem>>, vector<72x128xf32>
    %cst = arith.constant dense<0.000000e+00> : vector<512x128xf32>
    %6 = tpu.matmul %4, %5, %cst {dimension_numbers = #tpu.dot_dimension_numbers<[1], [0], [0], [1], [0, 0, 1, 1], [], []>} : vector<512x72xf32>, vector<72x128xf32>, vector<512x128xf32> -> vector<512x128xf32>
    %7 = arith.addf %3, %6 : vector<512x128xf32>
    %c0_6 = arith.constant 0 : index
    %c0_7 = arith.constant 0 : index
    %8 = vector.load %arg7[%c0_6, %c0_7] : memref<512x128xf32, #tpu.memory_space<vmem>>, vector<512x128xf32>
    tpu.vector_store %arg7[%c0_6, %c0_7], %7 {strides = array<i32>} : memref<512x128xf32, #tpu.memory_space<vmem>>, vector<512x128xf32>,
    %c0_i32_8 = arith.constant 0 : i32
    %9 = arith.cmpi eq, %arg2, %c0_i32_8 : i32
    %10 = arith.extui %9 : i1 to i32
    %c0_i32_9 = arith.constant 0 : i32
    %11 = arith.cmpi ne, %10, %c0_i32_9 : i32
    scf.if %11 {
      %c0_10 = arith.constant 0 : index
      %c0_11 = arith.constant 0 : index
      %12 = vector.load %arg7[%c0_10, %c0_11] : memref<512x128xf32, #tpu.memory_space<vmem>>, vector<512x128xf32>
      %c0_12 = arith.constant 0 : index
      %c0_13 = arith.constant 0 : index
      %13 = vector.load %arg5[%c0_12, %c0_13] : memref<512x128xf32, #tpu.memory_space<vmem>>, vector<512x128xf32>
      tpu.vector_store %arg5[%c0_12, %c0_13], %12 {strides = array<i32>} : memref<512x128xf32, #tpu.memory_space<vmem>>, vector<512x128xf32>,
      %cst_14 = arith.constant dense<0.000000e+00> : vector<128xf32>
      %14 = vector.multi_reduction <add>, %12, %cst_14 [0] : vector<512x128xf32> to vector<128xf32>
      %15 = vector.shape_cast %14 : vector<128xf32> to vector<1x128xf32>
      %16 = arith.mulf %12, %12 : vector<512x128xf32>
      %cst_15 = arith.constant dense<0.000000e+00> : vector<128xf32>
      %17 = vector.multi_reduction <add>, %16, %cst_15 [0] : vector<512x128xf32> to vector<128xf32>
      %18 = vector.shape_cast %17 : vector<128xf32> to vector<1x128xf32>
      %19 = tpu.concatenate %15, %18 in 0 : vector<1x128xf32>, vector<1x128xf32> -> vector<2x128xf32>
      %c0_16 = arith.constant 0 : index
      %c0_17 = arith.constant 0 : index
      %c0_18 = arith.constant 0 : index
      %20 = vector.load %arg6[%c0_16, %c0_17, %c0_18] : memref<1x2x128xf32, #tpu.memory_space<vmem>>, vector<1x2x128xf32>
      %21 = vector.shape_cast %20 : vector<1x2x128xf32> to vector<2x128xf32>
      %22 = vector.shape_cast %19 : vector<2x128xf32> to vector<1x2x128xf32>
      tpu.vector_store %arg6[%c0_16, %c0_17, %c0_18], %22 {strides = array<i32>} : memref<1x2x128xf32, #tpu.memory_space<vmem>>, vector<1x2x128xf32>,
    } else {
    }
    return
  }
  func.func @transform_0(%arg0: i32, %arg1: i32, %arg2: i32) -> (i32, i32) {
    %c0_i32 = arith.constant 0 : i32
    return %arg0, %arg2 : i32, i32
  }
  func.func @transform_1(%arg0: i32, %arg1: i32, %arg2: i32) -> (i32, i32) {
    %c0_i32 = arith.constant 0 : i32
    return %arg2, %arg1 : i32, i32
  }
  func.func @transform_2(%arg0: i32, %arg1: i32, %arg2: i32) -> (i32, i32) {
    %c0_i32 = arith.constant 0 : i32
    return %arg0, %arg1 : i32, i32
  }
  func.func @transform_3(%arg0: i32, %arg1: i32, %arg2: i32) -> (i32, i32, i32) {
    %c0_i32 = arith.constant 0 : i32
    %c0_i32_0 = arith.constant 0 : i32
    return %arg0, %c0_i32, %arg1 : i32, i32, i32
  }
}

module attributes {stable_mosaic.version = 11 : i64} {
  func.func @bn_relu_kernel(%arg0: i32, %arg1: memref<512x128xf32, #tpu.memory_space<vmem>>, %arg2: memref<1x128xf32, #tpu.memory_space<vmem>>, %arg3: memref<1x128xf32, #tpu.memory_space<vmem>>, %arg4: memref<512x128xf32, #tpu.memory_space<vmem>>) attributes {dimension_semantics = [#tpu.dimension_semantics<parallel>], iteration_bounds = array<i64: 1>, scalar_prefetch = 0 : i64, scratch_operands = 0 : i64, tpu.core_type = #tpu.core_type<tc>, window_params = [{transform_indices = @transform_0, window_bounds = array<i64: 512, 128>}, {pipeline_mode = #tpu.pipeline_mode<synchronous>, transform_indices = @transform_1, window_bounds = array<i64: 1, 128>}, {pipeline_mode = #tpu.pipeline_mode<synchronous>, transform_indices = @transform_2, window_bounds = array<i64: 1, 128>}, {transform_indices = @transform_3, window_bounds = array<i64: 512, 128>}]} {
    %c0 = arith.constant 0 : index
    %c0_0 = arith.constant 0 : index
    %0 = vector.load %arg1[%c0, %c0_0] : memref<512x128xf32, #tpu.memory_space<vmem>>, vector<512x128xf32>
    %c0_1 = arith.constant 0 : index
    %c0_2 = arith.constant 0 : index
    %1 = vector.load %arg2[%c0_1, %c0_2] : memref<1x128xf32, #tpu.memory_space<vmem>>, vector<1x128xf32>
    %2 = vector.broadcast %1 : vector<1x128xf32> to vector<512x128xf32>
    %3 = arith.mulf %0, %2 : vector<512x128xf32>
    %c0_3 = arith.constant 0 : index
    %c0_4 = arith.constant 0 : index
    %4 = vector.load %arg3[%c0_3, %c0_4] : memref<1x128xf32, #tpu.memory_space<vmem>>, vector<1x128xf32>
    %5 = vector.broadcast %4 : vector<1x128xf32> to vector<512x128xf32>
    %6 = arith.addf %3, %5 : vector<512x128xf32>
    %cst = arith.constant 0.000000e+00 : f32
    %7 = vector.broadcast %cst : f32 to vector<512x128xf32>
    %8 = arith.maximumf %6, %7 : vector<512x128xf32>
    %c0_5 = arith.constant 0 : index
    %c0_6 = arith.constant 0 : index
    %9 = vector.load %arg4[%c0_5, %c0_6] : memref<512x128xf32, #tpu.memory_space<vmem>>, vector<512x128xf32>
    tpu.vector_store %arg4[%c0_5, %c0_6], %8 {strides = array<i32>} : memref<512x128xf32, #tpu.memory_space<vmem>>, vector<512x128xf32>,
    return
  }
  func.func @transform_0(%arg0: i32) -> (i32, i32) {
    %c0_i32 = arith.constant 0 : i32
    %c0_i32_0 = arith.constant 0 : i32
    return %arg0, %c0_i32 : i32, i32
  }
  func.func @transform_1(%arg0: i32) -> (i32, i32) {
    %c0_i32 = arith.constant 0 : i32
    %c0_i32_0 = arith.constant 0 : i32
    %c0_i32_1 = arith.constant 0 : i32
    return %c0_i32, %c0_i32_0 : i32, i32
  }
  func.func @transform_2(%arg0: i32) -> (i32, i32) {
    %c0_i32 = arith.constant 0 : i32
    %c0_i32_0 = arith.constant 0 : i32
    %c0_i32_1 = arith.constant 0 : i32
    return %c0_i32, %c0_i32_0 : i32, i32
  }
  func.func @transform_3(%arg0: i32) -> (i32, i32) {
    %c0_i32 = arith.constant 0 : i32
    %c0_i32_0 = arith.constant 0 : i32
    return %arg0, %c0_i32 : i32, i32
  }
}

</mosaic_0001>

<llo_original>
// kernel: conv2d_batchnorm_relu.3
$region0: #{conv2d_batchnorm_relu.3}
  #allocation0 [shape = 'u32[]', space=smem, size = 0x4, offset = 0x4, fixed_abs, tag = 'smem constant byte address 0x4 - core index']
  #allocation1 [shape = 'u32[144,128]{1,0:T(1,128)}', space=vmem, size = 0x12000, scoped, tag = 'internal scratch']
  %s0 = inlined_call_operand.vmem [shape: f32[512,128], index: 0, kind: input, shape index: {}]
  %s1 = inlined_call_operand.vmem [shape: f32[1,128], index: 1, kind: input, shape index: {}]
  %s2 = inlined_call_operand.vmem [shape: f32[1,128], index: 2, kind: input, shape index: {}]
  %s3 = inlined_call_operand.vmem [shape: f32[512,128], index: 3, kind: output, shape index: {}]
  %s4 = sld [smem:[#allocation0]]
  $region22: #{conv2d_batchnorm_relu.3} parent=0
    _
  %s6 = ssub.s32 1, %s4
  %s7 = scalar_select 0, %s6, %s4
  // Predicated region
  $region2: #{conv2d_batchnorm_relu.3} parent=0 // pred_check
    _
  $region3: #{conv2d_batchnorm_relu.3} parent=0 // pred_check_branch
    %9 = sbr.rel (0) target = $region5
  $region4: #{conv2d_batchnorm_relu.3} parent=0 // pred_region
    _
  $region5: #{conv2d_batchnorm_relu.3} parent=0 // pred_fallthru
    _
  // Predicated region
  $region6: #{conv2d_batchnorm_relu.3} parent=0 // pred_check
    _
  $region7: #{conv2d_batchnorm_relu.3} parent=0 // pred_check_branch
    %11 = sbr.rel (0) target = $region9
  $region8: #{conv2d_batchnorm_relu.3} parent=0 // pred_region
    _
  $region9: #{conv2d_batchnorm_relu.3} parent=0 // pred_fallthru
    _
  // Predicated region
  $region10: #{conv2d_batchnorm_relu.3} parent=0 // pred_check
    _
  $region11: #{conv2d_batchnorm_relu.3} parent=0 // pred_check_branch
    %13 = sbr.rel (0) target = $region13
  $region12: #{conv2d_batchnorm_relu.3} parent=0 // pred_region
    _
  $region13: #{conv2d_batchnorm_relu.3} parent=0 // pred_fallthru
    _
  %v14 = vld [vmem:[%s0] sm:$0xff]
  %v15 = vld [vmem:[%s0 + $0x8] sm:$0xff]
  %v16 = vld [vmem:[%s0 + $0x10] sm:$0xff]
  %v17 = vld [vmem:[%s0 + $0x18] sm:$0xff]
  %v18 = vld [vmem:[%s0 + $0x20] sm:$0xff]
  %v19 = vld [vmem:[%s0 + $0x28] sm:$0xff]
  %v20 = vld [vmem:[%s0 + $0x30] sm:$0xff]
  %v21 = vld [vmem:[%s0 + $0x38] sm:$0xff]
  %v22 = vld [vmem:[%s0 + $0x40] sm:$0xff]
  %v23 = vld [vmem:[%s0 + $0x48] sm:$0xff]
  %v24 = vld [vmem:[%s0 + $0x50] sm:$0xff]
  %v25 = vld [vmem:[%s0 + $0x58] sm:$0xff]
  %v26 = vld [vmem:[%s0 + $0x60] sm:$0xff]
  %v27 = vld [vmem:[%s0 + $0x68] sm:$0xff]
  %v28 = vld [vmem:[%s0 + $0x70] sm:$0xff]
  %v29 = vld [vmem:[%s0 + $0x78] sm:$0xff]
  %v30 = vld [vmem:[%s0 + $0x80] sm:$0xff]
  %v31 = vld [vmem:[%s0 + $0x88] sm:$0xff]
  %v32 = vld [vmem:[%s0 + $0x90] sm:$0xff]
  %v33 = vld [vmem:[%s0 + $0x98] sm:$0xff]
  %v34 = vld [vmem:[%s0 + $0xa0] sm:$0xff]
  %v35 = vld [vmem:[%s0 + $0xa8] sm:$0xff]
  %v36 = vld [vmem:[%s0 + $0xb0] sm:$0xff]
  %v37 = vld [vmem:[%s0 + $0xb8] sm:$0xff]
  %v38 = vld [vmem:[%s0 + $0xc0] sm:$0xff]
  %v39 = vld [vmem:[%s0 + $0xc8] sm:$0xff]
  %v40 = vld [vmem:[%s0 + $0xd0] sm:$0xff]
  %v41 = vld [vmem:[%s0 + $0xd8] sm:$0xff]
  %v42 = vld [vmem:[%s0 + $0xe0] sm:$0xff]
  %v43 = vld [vmem:[%s0 + $0xe8] sm:$0xff]
  %v44 = vld [vmem:[%s0 + $0xf0] sm:$0xff]
  %v45 = vld [vmem:[%s0 + $0xf8] sm:$0xff]
  %v46 = vld [vmem:[%s0 + $0x100] sm:$0xff]
  %v47 = vld [vmem:[%s0 + $0x108] sm:$0xff]
  %v48 = vld [vmem:[%s0 + $0x110] sm:$0xff]
  %v49 = vld [vmem:[%s0 + $0x118] sm:$0xff]
  %v50 = vld [vmem:[%s0 + $0x120] sm:$0xff]
  %v51 = vld [vmem:[%s0 + $0x128] sm:$0xff]
  %v52 = vld [vmem:[%s0 + $0x130] sm:$0xff]
  %v53 = vld [vmem:[%s0 + $0x138] sm:$0xff]
  %v54 = vld [vmem:[%s0 + $0x140] sm:$0xff]
  %v55 = vld [vmem:[%s0 + $0x148] sm:$0xff]
  %v56 = vld [vmem:[%s0 + $0x150] sm:$0xff]
  %v57 = vld [vmem:[%s0 + $0x158] sm:$0xff]
  %v58 = vld [vmem:[%s0 + $0x160] sm:$0xff]
  %v59 = vld [vmem:[%s0 + $0x168] sm:$0xff]
  %v60 = vld [vmem:[%s0 + $0x170] sm:$0xff]
  %v61 = vld [vmem:[%s0 + $0x178] sm:$0xff]
  %v62 = vld [vmem:[%s0 + $0x180] sm:$0xff]
  %v63 = vld [vmem:[%s0 + $0x188] sm:$0xff]
  %v64 = vld [vmem:[%s0 + $0x190] sm:$0xff]
  %v65 = vld [vmem:[%s0 + $0x198] sm:$0xff]
  %v66 = vld [vmem:[%s0 + $0x1a0] sm:$0xff]
  %v67 = vld [vmem:[%s0 + $0x1a8] sm:$0xff]
  %v68 = vld [vmem:[%s0 + $0x1b0] sm:$0xff]
  %v69 = vld [vmem:[%s0 + $0x1b8] sm:$0xff]
  %v70 = vld [vmem:[%s0 + $0x1c0] sm:$0xff]
  %v71 = vld [vmem:[%s0 + $0x1c8] sm:$0xff]
  %v72 = vld [vmem:[%s0 + $0x1d0] sm:$0xff]
  %v73 = vld [vmem:[%s0 + $0x1d8] sm:$0xff]
  %v74 = vld [vmem:[%s0 + $0x1e0] sm:$0xff]
  %v75 = vld [vmem:[%s0 + $0x1e8] sm:$0xff]
  %v76 = vld [vmem:[%s0 + $0x1f0] sm:$0xff]
  %v77 = vld [vmem:[%s0 + $0x1f8] sm:$0xff]
  %v78 = vld [vmem:[%s1] sm:$0x1]
  %v80 = vlaneseq
  %v81 = vshrl.u32 %v80, 7
  %v82 = vsub.s32 0, %v81
  %v83 = vrot.slane %v78, %v82
  %v85 = vmul.f32 %v14, %v83
  %v86 = vmul.f32 %v15, %v83
  %v87 = vmul.f32 %v16, %v83
  %v88 = vmul.f32 %v17, %v83
  %v89 = vmul.f32 %v18, %v83
  %v90 = vmul.f32 %v19, %v83
  %v91 = vmul.f32 %v20, %v83
  %v92 = vmul.f32 %v21, %v83
  %v93 = vmul.f32 %v22, %v83
  %v94 = vmul.f32 %v23, %v83
  %v95 = vmul.f32 %v24, %v83
  %v96 = vmul.f32 %v25, %v83
  %v97 = vmul.f32 %v26, %v83
  %v98 = vmul.f32 %v27, %v83
  %v99 = vmul.f32 %v28, %v83
  %v100 = vmul.f32 %v29, %v83
  %v101 = vmul.f32 %v30, %v83
  %v102 = vmul.f32 %v31, %v83
  %v103 = vmul.f32 %v32, %v83
  %v104 = vmul.f32 %v33, %v83
  %v105 = vmul.f32 %v34, %v83
  %v106 = vmul.f32 %v35, %v83
  %v107 = vmul.f32 %v36, %v83
  %v108 = vmul.f32 %v37, %v83
  %v109 = vmul.f32 %v38, %v83
  %v110 = vmul.f32 %v39, %v83
  %v111 = vmul.f32 %v40, %v83
  %v112 = vmul.f32 %v41, %v83
  %v113 = vmul.f32 %v42, %v83
  %v114 = vmul.f32 %v43, %v83
  %v115 = vmul.f32 %v44, %v83
  %v116 = vmul.f32 %v45, %v83
  %v117 = vmul.f32 %v46, %v83
  %v118 = vmul.f32 %v47, %v83
  %v119 = vmul.f32 %v48, %v83
  %v120 = vmul.f32 %v49, %v83
  %v121 = vmul.f32 %v50, %v83
  %v122 = vmul.f32 %v51, %v83
  %v123 = vmul.f32 %v52, %v83
  %v124 = vmul.f32 %v53, %v83
  %v125 = vmul.f32 %v54, %v83
  %v126 = vmul.f32 %v55, %v83
  %v127 = vmul.f32 %v56, %v83
  %v128 = vmul.f32 %v57, %v83
  %v129 = vmul.f32 %v58, %v83
  %v130 = vmul.f32 %v59, %v83
  %v131 = vmul.f32 %v60, %v83
  %v132 = vmul.f32 %v61, %v83
  %v133 = vmul.f32 %v62, %v83
  %v134 = vmul.f32 %v63, %v83
  %v135 = vmul.f32 %v64, %v83
  %v136 = vmul.f32 %v65, %v83
  %v137 = vmul.f32 %v66, %v83
  %v138 = vmul.f32 %v67, %v83
  %v139 = vmul.f32 %v68, %v83
  %v140 = vmul.f32 %v69, %v83
  %v141 = vmul.f32 %v70, %v83
  %v142 = vmul.f32 %v71, %v83
  %v143 = vmul.f32 %v72, %v83
  %v144 = vmul.f32 %v73, %v83
  %v145 = vmul.f32 %v74, %v83
  %v146 = vmul.f32 %v75, %v83
  %v147 = vmul.f32 %v76, %v83
  %v148 = vmul.f32 %v77, %v83
  %v149 = vld [vmem:[%s2] sm:$0x1]
  %v151 = vlaneseq
  %v152 = vshrl.u32 %v151, 7
  %v153 = vsub.s32 0, %v152
  %v154 = vrot.slane %v149, %v153
  %v156 = vadd.f32 %v85, %v154
  %v157 = vadd.f32 %v86, %v154
  %v158 = vadd.f32 %v87, %v154
  %v159 = vadd.f32 %v88, %v154
  %v160 = vadd.f32 %v89, %v154
  %v161 = vadd.f32 %v90, %v154
  %v162 = vadd.f32 %v91, %v154
  %v163 = vadd.f32 %v92, %v154
  %v164 = vadd.f32 %v93, %v154
  %v165 = vadd.f32 %v94, %v154
  %v166 = vadd.f32 %v95, %v154
  %v167 = vadd.f32 %v96, %v154
  %v168 = vadd.f32 %v97, %v154
  %v169 = vadd.f32 %v98, %v154
  %v170 = vadd.f32 %v99, %v154
  %v171 = vadd.f32 %v100, %v154
  %v172 = vadd.f32 %v101, %v154
  %v173 = vadd.f32 %v102, %v154
  %v174 = vadd.f32 %v103, %v154
  %v175 = vadd.f32 %v104, %v154
  %v176 = vadd.f32 %v105, %v154
  %v177 = vadd.f32 %v106, %v154
  %v178 = vadd.f32 %v107, %v154
  %v179 = vadd.f32 %v108, %v154
  %v180 = vadd.f32 %v109, %v154
  %v181 = vadd.f32 %v110, %v154
  %v182 = vadd.f32 %v111, %v154
  %v183 = vadd.f32 %v112, %v154
  %v184 = vadd.f32 %v113, %v154
  %v185 = vadd.f32 %v114, %v154
  %v186 = vadd.f32 %v115, %v154
  %v187 = vadd.f32 %v116, %v154
  %v188 = vadd.f32 %v117, %v154
  %v189 = vadd.f32 %v118, %v154
  %v190 = vadd.f32 %v119, %v154
  %v191 = vadd.f32 %v120, %v154
  %v192 = vadd.f32 %v121, %v154
  %v193 = vadd.f32 %v122, %v154
  %v194 = vadd.f32 %v123, %v154
  %v195 = vadd.f32 %v124, %v154
  %v196 = vadd.f32 %v125, %v154
  %v197 = vadd.f32 %v126, %v154
  %v198 = vadd.f32 %v127, %v154
  %v199 = vadd.f32 %v128, %v154
  %v200 = vadd.f32 %v129, %v154
  %v201 = vadd.f32 %v130, %v154
  %v202 = vadd.f32 %v131, %v154
  %v203 = vadd.f32 %v132, %v154
  %v204 = vadd.f32 %v133, %v154
  %v205 = vadd.f32 %v134, %v154
  %v206 = vadd.f32 %v135, %v154
  %v207 = vadd.f32 %v136, %v154
  %v208 = vadd.f32 %v137, %v154
  %v209 = vadd.f32 %v138, %v154
  %v210 = vadd.f32 %v139, %v154
  %v211 = vadd.f32 %v140, %v154
  %v212 = vadd.f32 %v141, %v154
  %v213 = vadd.f32 %v142, %v154
  %v214 = vadd.f32 %v143, %v154
  %v215 = vadd.f32 %v144, %v154
  %v216 = vadd.f32 %v145, %v154
  %v217 = vadd.f32 %v146, %v154
  %v218 = vadd.f32 %v147, %v154
  %v219 = vadd.f32 %v148, %v154
  %v220 = vmax.f32 %v156, 0.0
  %v221 = vmax.f32 %v157, 0.0
  %v222 = vmax.f32 %v158, 0.0
  %v223 = vmax.f32 %v159, 0.0
  %v224 = vmax.f32 %v160, 0.0
  %v225 = vmax.f32 %v161, 0.0
  %v226 = vmax.f32 %v162, 0.0
  %v227 = vmax.f32 %v163, 0.0
  %v228 = vmax.f32 %v164, 0.0
  %v229 = vmax.f32 %v165, 0.0
  %v230 = vmax.f32 %v166, 0.0
  %v231 = vmax.f32 %v167, 0.0
  %v232 = vmax.f32 %v168, 0.0
  %v233 = vmax.f32 %v169, 0.0
  %v234 = vmax.f32 %v170, 0.0
  %v235 = vmax.f32 %v171, 0.0
  %v236 = vmax.f32 %v172, 0.0
  %v237 = vmax.f32 %v173, 0.0
  %v238 = vmax.f32 %v174, 0.0
  %v239 = vmax.f32 %v175, 0.0
  %v240 = vmax.f32 %v176, 0.0
  %v241 = vmax.f32 %v177, 0.0
  %v242 = vmax.f32 %v178, 0.0
  %v243 = vmax.f32 %v179, 0.0
  %v244 = vmax.f32 %v180, 0.0
  %v245 = vmax.f32 %v181, 0.0
  %v246 = vmax.f32 %v182, 0.0
  %v247 = vmax.f32 %v183, 0.0
  %v248 = vmax.f32 %v184, 0.0
  %v249 = vmax.f32 %v185, 0.0
  %v250 = vmax.f32 %v186, 0.0
  %v251 = vmax.f32 %v187, 0.0
  %v252 = vmax.f32 %v188, 0.0
  %v253 = vmax.f32 %v189, 0.0
  %v254 = vmax.f32 %v190, 0.0
  %v255 = vmax.f32 %v191, 0.0
  %v256 = vmax.f32 %v192, 0.0
  %v257 = vmax.f32 %v193, 0.0
  %v258 = vmax.f32 %v194, 0.0
  %v259 = vmax.f32 %v195, 0.0
  %v260 = vmax.f32 %v196, 0.0
  %v261 = vmax.f32 %v197, 0.0
  %v262 = vmax.f32 %v198, 0.0
  %v263 = vmax.f32 %v199, 0.0
  %v264 = vmax.f32 %v200, 0.0
  %v265 = vmax.f32 %v201, 0.0
  %v266 = vmax.f32 %v202, 0.0
  %v267 = vmax.f32 %v203, 0.0
  %v268 = vmax.f32 %v204, 0.0
  %v269 = vmax.f32 %v205, 0.0
  %v270 = vmax.f32 %v206, 0.0
  %v271 = vmax.f32 %v207, 0.0
  %v272 = vmax.f32 %v208, 0.0
  %v273 = vmax.f32 %v209, 0.0
  %v274 = vmax.f32 %v210, 0.0
  %v275 = vmax.f32 %v211, 0.0
  %v276 = vmax.f32 %v212, 0.0
  %v277 = vmax.f32 %v213, 0.0
  %v278 = vmax.f32 %v214, 0.0
  %v279 = vmax.f32 %v215, 0.0
  %v280 = vmax.f32 %v216, 0.0
  %v281 = vmax.f32 %v217, 0.0
  %v282 = vmax.f32 %v218, 0.0
  %v283 = vmax.f32 %v219, 0.0
  %284 = vst [vmem:[%s3] sm:$0xff] %v220
  %285 = vst [vmem:[%s3 + $0x8] sm:$0xff] %v221
  %286 = vst [vmem:[%s3 + $0x10] sm:$0xff] %v222
  %287 = vst [vmem:[%s3 + $0x18] sm:$0xff] %v223
  %288 = vst [vmem:[%s3 + $0x20] sm:$0xff] %v224
  %289 = vst [vmem:[%s3 + $0x28] sm:$0xff] %v225
  %290 = vst [vmem:[%s3 + $0x30] sm:$0xff] %v226
  %291 = vst [vmem:[%s3 + $0x38] sm:$0xff] %v227
  %292 = vst [vmem:[%s3 + $0x40] sm:$0xff] %v228
  %293 = vst [vmem:[%s3 + $0x48] sm:$0xff] %v229
  %294 = vst [vmem:[%s3 + $0x50] sm:$0xff] %v230
  %295 = vst [vmem:[%s3 + $0x58] sm:$0xff] %v231
  %296 = vst [vmem:[%s3 + $0x60] sm:$0xff] %v232
  %297 = vst [vmem:[%s3 + $0x68] sm:$0xff] %v233
  %298 = vst [vmem:[%s3 + $0x70] sm:$0xff] %v234
  %299 = vst [vmem:[%s3 + $0x78] sm:$0xff] %v235
  %300 = vst [vmem:[%s3 + $0x80] sm:$0xff] %v236
  %301 = vst [vmem:[%s3 + $0x88] sm:$0xff] %v237
  %302 = vst [vmem:[%s3 + $0x90] sm:$0xff] %v238
  %303 = vst [vmem:[%s3 + $0x98] sm:$0xff] %v239
  %304 = vst [vmem:[%s3 + $0xa0] sm:$0xff] %v240
  %305 = vst [vmem:[%s3 + $0xa8] sm:$0xff] %v241
  %306 = vst [vmem:[%s3 + $0xb0] sm:$0xff] %v242
  %307 = vst [vmem:[%s3 + $0xb8] sm:$0xff] %v243
  %308 = vst [vmem:[%s3 + $0xc0] sm:$0xff] %v244
  %309 = vst [vmem:[%s3 + $0xc8] sm:$0xff] %v245
  %310 = vst [vmem:[%s3 + $0xd0] sm:$0xff] %v246
  %311 = vst [vmem:[%s3 + $0xd8] sm:$0xff] %v247
  %312 = vst [vmem:[%s3 + $0xe0] sm:$0xff] %v248
  %313 = vst [vmem:[%s3 + $0xe8] sm:$0xff] %v249
  %314 = vst [vmem:[%s3 + $0xf0] sm:$0xff] %v250
  %315 = vst [vmem:[%s3 + $0xf8] sm:$0xff] %v251
  %316 = vst [vmem:[%s3 + $0x100] sm:$0xff] %v252
  %317 = vst [vmem:[%s3 + $0x108] sm:$0xff] %v253
  %318 = vst [vmem:[%s3 + $0x110] sm:$0xff] %v254
  %319 = vst [vmem:[%s3 + $0x118] sm:$0xff] %v255
  %320 = vst [vmem:[%s3 + $0x120] sm:$0xff] %v256
  %321 = vst [vmem:[%s3 + $0x128] sm:$0xff] %v257
  %322 = vst [vmem:[%s3 + $0x130] sm:$0xff] %v258
  %323 = vst [vmem:[%s3 + $0x138] sm:$0xff] %v259
  %324 = vst [vmem:[%s3 + $0x140] sm:$0xff] %v260
  %325 = vst [vmem:[%s3 + $0x148] sm:$0xff] %v261
  %326 = vst [vmem:[%s3 + $0x150] sm:$0xff] %v262
  %327 = vst [vmem:[%s3 + $0x158] sm:$0xff] %v263
  %328 = vst [vmem:[%s3 + $0x160] sm:$0xff] %v264
  %329 = vst [vmem:[%s3 + $0x168] sm:$0xff] %v265
  %330 = vst [vmem:[%s3 + $0x170] sm:$0xff] %v266
  %331 = vst [vmem:[%s3 + $0x178] sm:$0xff] %v267
  %332 = vst [vmem:[%s3 + $0x180] sm:$0xff] %v268
  %333 = vst [vmem:[%s3 + $0x188] sm:$0xff] %v269
  %334 = vst [vmem:[%s3 + $0x190] sm:$0xff] %v270
  %335 = vst [vmem:[%s3 + $0x198] sm:$0xff] %v271
  %336 = vst [vmem:[%s3 + $0x1a0] sm:$0xff] %v272
  %337 = vst [vmem:[%s3 + $0x1a8] sm:$0xff] %v273
  %338 = vst [vmem:[%s3 + $0x1b0] sm:$0xff] %v274
  %339 = vst [vmem:[%s3 + $0x1b8] sm:$0xff] %v275
  %340 = vst [vmem:[%s3 + $0x1c0] sm:$0xff] %v276
  %341 = vst [vmem:[%s3 + $0x1c8] sm:$0xff] %v277
  %342 = vst [vmem:[%s3 + $0x1d0] sm:$0xff] %v278
  %343 = vst [vmem:[%s3 + $0x1d8] sm:$0xff] %v279
  %344 = vst [vmem:[%s3 + $0x1e0] sm:$0xff] %v280
  %345 = vst [vmem:[%s3 + $0x1e8] sm:$0xff] %v281
  %346 = vst [vmem:[%s3 + $0x1f0] sm:$0xff] %v282
  %347 = vst [vmem:[%s3 + $0x1f8] sm:$0xff] %v283
  // Predicated region
  $region14: #{conv2d_batchnorm_relu.3} parent=0 // pred_check
    _
  $region15: #{conv2d_batchnorm_relu.3} parent=0 // pred_check_branch
    %349 = sbr.rel (0) target = $region17
  $region16: #{conv2d_batchnorm_relu.3} parent=0 // pred_region
    _
  $region17: #{conv2d_batchnorm_relu.3} parent=0 // pred_fallthru
    _
  // Predicated region
  $region18: #{conv2d_batchnorm_relu.3} parent=0 // pred_check
    _
  $region19: #{conv2d_batchnorm_relu.3} parent=0 // pred_check_branch
    %351 = sbr.rel (0) target = $region21
  $region20: #{conv2d_batchnorm_relu.3} parent=0 // pred_region
    _
  $region21: #{conv2d_batchnorm_relu.3} parent=0 // pred_fallthru
    _

// kernel: conv2d_batchnorm_relu.2
$region0: #{conv2d_batchnorm_relu.2}
  #allocation0 [shape = 'u32[]', space=smem, size = 0x4, offset = 0x4, fixed_abs, tag = 'smem constant byte address 0x4 - core index']
  #allocation1 [shape = 'u32[144,128]{1,0:T(1,128)}', space=vmem, size = 0x12000, scoped, tag = 'internal scratch']
  #allocation2 [shape = 'f32[512,128]{1,0:T(8,128)}', space=vmem, size = 0x40000, scoped, tag = 'scratch operand']
  %s0 = inlined_call_operand.vmem [shape: f32[512,72], index: 0, kind: input, shape index: {}]
  %s1 = inlined_call_operand.vmem [shape: f32[72,128], index: 1, kind: input, shape index: {}]
  %s2 = inlined_call_operand.vmem [shape: f32[512,128], index: 2, kind: output, shape index: {0}]
  %s3 = inlined_call_operand.vmem [shape: f32[1,2,128], index: 3, kind: output, shape index: {1}]
  %4 = xla_tuple %s2, %s3
  %s5 = sld [smem:[#allocation0]]
  $region34: #{conv2d_batchnorm_relu.2} parent=0
    _
  %s7 = ssub.s32 1, %s5
  %s8 = scalar_select 0, %s7, %s5
  // Predicated region
  $region2: #{conv2d_batchnorm_relu.2} parent=0 // pred_check
    _
  $region3: #{conv2d_batchnorm_relu.2} parent=0 // pred_check_branch
    %10 = sbr.rel (0) target = $region5
  $region4: #{conv2d_batchnorm_relu.2} parent=0 // pred_region
    _
  $region5: #{conv2d_batchnorm_relu.2} parent=0 // pred_fallthru
    _
  // Predicated region
  $region6: #{conv2d_batchnorm_relu.2} parent=0 // pred_check
    _
  $region7: #{conv2d_batchnorm_relu.2} parent=0 // pred_check_branch
    %12 = sbr.rel (0) target = $region9
  $region8: #{conv2d_batchnorm_relu.2} parent=0 // pred_region
    _
  $region9: #{conv2d_batchnorm_relu.2} parent=0 // pred_fallthru
    _
  %p13 = scmp.eq.s32.totalorder 0, 0
  // Predicated region
  $region10: #{conv2d_batchnorm_relu.2} parent=0 // pred_check
    %p14 = pneg %p13
  $region11: #{conv2d_batchnorm_relu.2} parent=0 // pred_check_branch
    %16 = sbr.rel (%p14) target = $region13
  $region12: #{conv2d_batchnorm_relu.2} parent=0 // pred_region
    %17 = vst [vmem:[#allocation2] sm:$0xff] 0.0
    %18 = vst [vmem:[#allocation2 + $0x8] sm:$0xff] 0.0
    %19 = vst [vmem:[#allocation2 + $0x10] sm:$0xff] 0.0
    %20 = vst [vmem:[#allocation2 + $0x18] sm:$0xff] 0.0
    %21 = vst [vmem:[#allocation2 + $0x20] sm:$0xff] 0.0
    %22 = vst [vmem:[#allocation2 + $0x28] sm:$0xff] 0.0
    %23 = vst [vmem:[#allocation2 + $0x30] sm:$0xff] 0.0
    %24 = vst [vmem:[#allocation2 + $0x38] sm:$0xff] 0.0
    %25 = vst [vmem:[#allocation2 + $0x40] sm:$0xff] 0.0
    %26 = vst [vmem:[#allocation2 + $0x48] sm:$0xff] 0.0
    %27 = vst [vmem:[#allocation2 + $0x50] sm:$0xff] 0.0
    %28 = vst [vmem:[#allocation2 + $0x58] sm:$0xff] 0.0
    %29 = vst [vmem:[#allocation2 + $0x60] sm:$0xff] 0.0
    %30 = vst [vmem:[#allocation2 + $0x68] sm:$0xff] 0.0
    %31 = vst [vmem:[#allocation2 + $0x70] sm:$0xff] 0.0
    %32 = vst [vmem:[#allocation2 + $0x78] sm:$0xff] 0.0
    %33 = vst [vmem:[#allocation2 + $0x80] sm:$0xff] 0.0
    %34 = vst [vmem:[#allocation2 + $0x88] sm:$0xff] 0.0
    %35 = vst [vmem:[#allocation2 + $0x90] sm:$0xff] 0.0
    %36 = vst [vmem:[#allocation2 + $0x98] sm:$0xff] 0.0
    %37 = vst [vmem:[#allocation2 + $0xa0] sm:$0xff] 0.0
    %38 = vst [vmem:[#allocation2 + $0xa8] sm:$0xff] 0.0
    %39 = vst [vmem:[#allocation2 + $0xb0] sm:$0xff] 0.0
    %40 = vst [vmem:[#allocation2 + $0xb8] sm:$0xff] 0.0
    %41 = vst [vmem:[#allocation2 + $0xc0] sm:$0xff] 0.0
    %42 = vst [vmem:[#allocation2 + $0xc8] sm:$0xff] 0.0
    %43 = vst [vmem:[#allocation2 + $0xd0] sm:$0xff] 0.0
    %44 = vst [vmem:[#allocation2 + $0xd8] sm:$0xff] 0.0
    %45 = vst [vmem:[#allocation2 + $0xe0] sm:$0xff] 0.0
    %46 = vst [vmem:[#allocation2 + $0xe8] sm:$0xff] 0.0
    %47 = vst [vmem:[#allocation2 + $0xf0] sm:$0xff] 0.0
    %48 = vst [vmem:[#allocation2 + $0xf8] sm:$0xff] 0.0
    %49 = vst [vmem:[#allocation2 + $0x100] sm:$0xff] 0.0
    %50 = vst [vmem:[#allocation2 + $0x108] sm:$0xff] 0.0
    %51 = vst [vmem:[#allocation2 + $0x110] sm:$0xff] 0.0
    %52 = vst [vmem:[#allocation2 + $0x118] sm:$0xff] 0.0
    %53 = vst [vmem:[#allocation2 + $0x120] sm:$0xff] 0.0
    %54 = vst [vmem:[#allocation2 + $0x128] sm:$0xff] 0.0
    %55 = vst [vmem:[#allocation2 + $0x130] sm:$0xff] 0.0
    %56 = vst [vmem:[#allocation2 + $0x138] sm:$0xff] 0.0
    %57 = vst [vmem:[#allocation2 + $0x140] sm:$0xff] 0.0
    %58 = vst [vmem:[#allocation2 + $0x148] sm:$0xff] 0.0
    %59 = vst [vmem:[#allocation2 + $0x150] sm:$0xff] 0.0
    %60 = vst [vmem:[#allocation2 + $0x158] sm:$0xff] 0.0
    %61 = vst [vmem:[#allocation2 + $0x160] sm:$0xff] 0.0
    %62 = vst [vmem:[#allocation2 + $0x168] sm:$0xff] 0.0
    %63 = vst [vmem:[#allocation2 + $0x170] sm:$0xff] 0.0
    %64 = vst [vmem:[#allocation2 + $0x178] sm:$0xff] 0.0
    %65 = vst [vmem:[#allocation2 + $0x180] sm:$0xff] 0.0
    %66 = vst [vmem:[#allocation2 + $0x188] sm:$0xff] 0.0
    %67 = vst [vmem:[#allocation2 + $0x190] sm:$0xff] 0.0
    %68 = vst [vmem:[#allocation2 + $0x198] sm:$0xff] 0.0
    %69 = vst [vmem:[#allocation2 + $0x1a0] sm:$0xff] 0.0
    %70 = vst [vmem:[#allocation2 + $0x1a8] sm:$0xff] 0.0
    %71 = vst [vmem:[#allocation2 + $0x1b0] sm:$0xff] 0.0
    %72 = vst [vmem:[#allocation2 + $0x1b8] sm:$0xff] 0.0
    %73 = vst [vmem:[#allocation2 + $0x1c0] sm:$0xff] 0.0
    %74 = vst [vmem:[#allocation2 + $0x1c8] sm:$0xff] 0.0
    %75 = vst [vmem:[#allocation2 + $0x1d0] sm:$0xff] 0.0
    %76 = vst [vmem:[#allocation2 + $0x1d8] sm:$0xff] 0.0
    %77 = vst [vmem:[#allocation2 + $0x1e0] sm:$0xff] 0.0
    %78 = vst [vmem:[#allocation2 + $0x1e8] sm:$0xff] 0.0
    %79 = vst [vmem:[#allocation2 + $0x1f0] sm:$0xff] 0.0
    %80 = vst [vmem:[#allocation2 + $0x1f8] sm:$0xff] 0.0
  $region13: #{conv2d_batchnorm_relu.2} parent=0 // pred_fallthru
    _
  %v81 = vld [vmem:[#allocation2] sm:$0xff]
  %v82 = vld [vmem:[#allocation2 + $0x8] sm:$0xff]
  %v83 = vld [vmem:[#allocation2 + $0x10] sm:$0xff]
  %v84 = vld [vmem:[#allocation2 + $0x18] sm:$0xff]
  %v85 = vld [vmem:[#allocation2 + $0x20] sm:$0xff]
  %v86 = vld [vmem:[#allocation2 + $0x28] sm:$0xff]
  %v87 = vld [vmem:[#allocation2 + $0x30] sm:$0xff]
  %v88 = vld [vmem:[#allocation2 + $0x38] sm:$0xff]
  %v89 = vld [vmem:[#allocation2 + $0x40] sm:$0xff]
  %v90 = vld [vmem:[#allocation2 + $0x48] sm:$0xff]
  %v91 = vld [vmem:[#allocation2 + $0x50] sm:$0xff]
  %v92 = vld [vmem:[#allocation2 + $0x58] sm:$0xff]
  %v93 = vld [vmem:[#allocation2 + $0x60] sm:$0xff]
  %v94 = vld [vmem:[#allocation2 + $0x68] sm:$0xff]
  %v95 = vld [vmem:[#allocation2 + $0x70] sm:$0xff]
  %v96 = vld [vmem:[#allocation2 + $0x78] sm:$0xff]
  %v97 = vld [vmem:[#allocation2 + $0x80] sm:$0xff]
  %v98 = vld [vmem:[#allocation2 + $0x88] sm:$0xff]
  %v99 = vld [vmem:[#allocation2 + $0x90] sm:$0xff]
  %v100 = vld [vmem:[#allocation2 + $0x98] sm:$0xff]
  %v101 = vld [vmem:[#allocation2 + $0xa0] sm:$0xff]
  %v102 = vld [vmem:[#allocation2 + $0xa8] sm:$0xff]
  %v103 = vld [vmem:[#allocation2 + $0xb0] sm:$0xff]
  %v104 = vld [vmem:[#allocation2 + $0xb8] sm:$0xff]
  %v105 = vld [vmem:[#allocation2 + $0xc0] sm:$0xff]
  %v106 = vld [vmem:[#allocation2 + $0xc8] sm:$0xff]
  %v107 = vld [vmem:[#allocation2 + $0xd0] sm:$0xff]
  %v108 = vld [vmem:[#allocation2 + $0xd8] sm:$0xff]
  %v109 = vld [vmem:[#allocation2 + $0xe0] sm:$0xff]
  %v110 = vld [vmem:[#allocation2 + $0xe8] sm:$0xff]
  %v111 = vld [vmem:[#allocation2 + $0xf0] sm:$0xff]
  %v112 = vld [vmem:[#allocation2 + $0xf8] sm:$0xff]
  %v113 = vld [vmem:[#allocation2 + $0x100] sm:$0xff]
  %v114 = vld [vmem:[#allocation2 + $0x108] sm:$0xff]
  %v115 = vld [vmem:[#allocation2 + $0x110] sm:$0xff]
  %v116 = vld [vmem:[#allocation2 + $0x118] sm:$0xff]
  %v117 = vld [vmem:[#allocation2 + $0x120] sm:$0xff]
  %v118 = vld [vmem:[#allocation2 + $0x128] sm:$0xff]
  %v119 = vld [vmem:[#allocation2 + $0x130] sm:$0xff]
  %v120 = vld [vmem:[#allocation2 + $0x138] sm:$0xff]
  %v121 = vld [vmem:[#allocation2 + $0x140] sm:$0xff]
  %v122 = vld [vmem:[#allocation2 + $0x148] sm:$0xff]
  %v123 = vld [vmem:[#allocation2 + $0x150] sm:$0xff]
  %v124 = vld [vmem:[#allocation2 + $0x158] sm:$0xff]
  %v125 = vld [vmem:[#allocation2 + $0x160] sm:$0xff]
  %v126 = vld [vmem:[#allocation2 + $0x168] sm:$0xff]
  %v127 = vld [vmem:[#allocation2 + $0x170] sm:$0xff]
  %v128 = vld [vmem:[#allocation2 + $0x178] sm:$0xff]
  %v129 = vld [vmem:[#allocation2 + $0x180] sm:$0xff]
  %v130 = vld [vmem:[#allocation2 + $0x188] sm:$0xff]
  %v131 = vld [vmem:[#allocation2 + $0x190] sm:$0xff]
  %v132 = vld [vmem:[#allocation2 + $0x198] sm:$0xff]
  %v133 = vld [vmem:[#allocation2 + $0x1a0] sm:$0xff]
  %v134 = vld [vmem:[#allocation2 + $0x1a8] sm:$0xff]
  %v135 = vld [vmem:[#allocation2 + $0x1b0] sm:$0xff]
  %v136 = vld [vmem:[#allocation2 + $0x1b8] sm:$0xff]
  %v137 = vld [vmem:[#allocation2 + $0x1c0] sm:$0xff]
  %v138 = vld [vmem:[#allocation2 + $0x1c8] sm:$0xff]
  %v139 = vld [vmem:[#allocation2 + $0x1d0] sm:$0xff]
  %v140 = vld [vmem:[#allocation2 + $0x1d8] sm:$0xff]
  %v141 = vld [vmem:[#allocation2 + $0x1e0] sm:$0xff]
  %v142 = vld [vmem:[#allocation2 + $0x1e8] sm:$0xff]
  %v143 = vld [vmem:[#allocation2 + $0x1f0] sm:$0xff]
  %v144 = vld [vmem:[#allocation2 + $0x1f8] sm:$0xff]
  %v145 = vld [vmem:[%s0] sm:$0xff]
  %v146 = vld [vmem:[%s0 + $0x8] sm:$0xff]
  %v147 = vld [vmem:[%s0 + $0x10] sm:$0xff]
  %v148 = vld [vmem:[%s0 + $0x18] sm:$0xff]
  %v149 = vld [vmem:[%s0 + $0x20] sm:$0xff]
  %v150 = vld [vmem:[%s0 + $0x28] sm:$0xff]
  %v151 = vld [vmem:[%s0 + $0x30] sm:$0xff]
  %v152 = vld [vmem:[%s0 + $0x38] sm:$0xff]
  %v153 = vld [vmem:[%s0 + $0x40] sm:$0xff]
  %v154 = vld [vmem:[%s0 + $0x48] sm:$0xff]
  %v155 = vld [vmem:[%s0 + $0x50] sm:$0xff]
  %v156 = vld [vmem:[%s0 + $0x58] sm:$0xff]
  %v157 = vld [vmem:[%s0 + $0x60] sm:$0xff]
  %v158 = vld [vmem:[%s0 + $0x68] sm:$0xff]
  %v159 = vld [vmem:[%s0 + $0x70] sm:$0xff]
  %v160 = vld [vmem:[%s0 + $0x78] sm:$0xff]
  %v161 = vld [vmem:[%s0 + $0x80] sm:$0xff]
  %v162 = vld [vmem:[%s0 + $0x88] sm:$0xff]
  %v163 = vld [vmem:[%s0 + $0x90] sm:$0xff]
  %v164 = vld [vmem:[%s0 + $0x98] sm:$0xff]
  %v165 = vld [vmem:[%s0 + $0xa0] sm:$0xff]
  %v166 = vld [vmem:[%s0 + $0xa8] sm:$0xff]
  %v167 = vld [vmem:[%s0 + $0xb0] sm:$0xff]
  %v168 = vld [vmem:[%s0 + $0xb8] sm:$0xff]
  %v169 = vld [vmem:[%s0 + $0xc0] sm:$0xff]
  %v170 = vld [vmem:[%s0 + $0xc8] sm:$0xff]
  %v171 = vld [vmem:[%s0 + $0xd0] sm:$0xff]
  %v172 = vld [vmem:[%s0 + $0xd8] sm:$0xff]
  %v173 = vld [vmem:[%s0 + $0xe0] sm:$0xff]
  %v174 = vld [vmem:[%s0 + $0xe8] sm:$0xff]
  %v175 = vld [vmem:[%s0 + $0xf0] sm:$0xff]
  %v176 = vld [vmem:[%s0 + $0xf8] sm:$0xff]
  %v177 = vld [vmem:[%s0 + $0x100] sm:$0xff]
  %v178 = vld [vmem:[%s0 + $0x108] sm:$0xff]
  %v179 = vld [vmem:[%s0 + $0x110] sm:$0xff]
  %v180 = vld [vmem:[%s0 + $0x118] sm:$0xff]
  %v181 = vld [vmem:[%s0 + $0x120] sm:$0xff]
  %v182 = vld [vmem:[%s0 + $0x128] sm:$0xff]
  %v183 = vld [vmem:[%s0 + $0x130] sm:$0xff]
  %v184 = vld [vmem:[%s0 + $0x138] sm:$0xff]
  %v185 = vld [vmem:[%s0 + $0x140] sm:$0xff]
  %v186 = vld [vmem:[%s0 + $0x148] sm:$0xff]
  %v187 = vld [vmem:[%s0 + $0x150] sm:$0xff]
  %v188 = vld [vmem:[%s0 + $0x158] sm:$0xff]
  %v189 = vld [vmem:[%s0 + $0x160] sm:$0xff]
  %v190 = vld [vmem:[%s0 + $0x168] sm:$0xff]
  %v191 = vld [vmem:[%s0 + $0x170] sm:$0xff]
  %v192 = vld [vmem:[%s0 + $0x178] sm:$0xff]
  %v193 = vld [vmem:[%s0 + $0x180] sm:$0xff]
  %v194 = vld [vmem:[%s0 + $0x188] sm:$0xff]
  %v195 = vld [vmem:[%s0 + $0x190] sm:$0xff]
  %v196 = vld [vmem:[%s0 + $0x198] sm:$0xff]
  %v197 = vld [vmem:[%s0 + $0x1a0] sm:$0xff]
  %v198 = vld [vmem:[%s0 + $0x1a8] sm:$0xff]
  %v199 = vld [vmem:[%s0 + $0x1b0] sm:$0xff]
  %v200 = vld [vmem:[%s0 + $0x1b8] sm:$0xff]
  %v201 = vld [vmem:[%s0 + $0x1c0] sm:$0xff]
  %v202 = vld [vmem:[%s0 + $0x1c8] sm:$0xff]
  %v203 = vld [vmem:[%s0 + $0x1d0] sm:$0xff]
  %v204 = vld [vmem:[%s0 + $0x1d8] sm:$0xff]
  %v205 = vld [vmem:[%s0 + $0x1e0] sm:$0xff]
  %v206 = vld [vmem:[%s0 + $0x1e8] sm:$0xff]
  %v207 = vld [vmem:[%s0 + $0x1f0] sm:$0xff]
  %v208 = vld [vmem:[%s0 + $0x1f8] sm:$0xff]
  %v209 = vld [vmem:[%s1] sm:$0xff]
  %v210 = vld [vmem:[%s1 + $0x8] sm:$0xff]
  %v211 = vld [vmem:[%s1 + $0x10] sm:$0xff]
  %v212 = vld [vmem:[%s1 + $0x18] sm:$0xff]
  %v213 = vld [vmem:[%s1 + $0x20] sm:$0xff]
  %v214 = vld [vmem:[%s1 + $0x28] sm:$0xff]
  %v215 = vld [vmem:[%s1 + $0x30] sm:$0xff]
  %v216 = vld [vmem:[%s1 + $0x38] sm:$0xff]
  %v217 = vld [vmem:[%s1 + $0x40] sm:$0xff]
  %vm218 = vcmask 588800
  %v220 = vsel %vm218, %v145, 0
  %v223 = vsel %vm218, %v146, 0
  %v226 = vsel %vm218, %v147, 0
  %v229 = vsel %vm218, %v148, 0
  %v232 = vsel %vm218, %v149, 0
  %v235 = vsel %vm218, %v150, 0
  %v238 = vsel %vm218, %v151, 0
  %v241 = vsel %vm218, %v152, 0
  %v244 = vsel %vm218, %v153, 0
  %v247 = vsel %vm218, %v154, 0
  %v250 = vsel %vm218, %v155, 0
  %v253 = vsel %vm218, %v156, 0
  %v256 = vsel %vm218, %v157, 0
  %v259 = vsel %vm218, %v158, 0
  %v262 = vsel %vm218, %v159, 0
  %v265 = vsel %vm218, %v160, 0
  %v268 = vsel %vm218, %v161, 0
  %v271 = vsel %vm218, %v162, 0
  %v274 = vsel %vm218, %v163, 0
  %v277 = vsel %vm218, %v164, 0
  %v280 = vsel %vm218, %v165, 0
  %v283 = vsel %vm218, %v166, 0
  %v286 = vsel %vm218, %v167, 0
  %v289 = vsel %vm218, %v168, 0
  %v292 = vsel %vm218, %v169, 0
  %v295 = vsel %vm218, %v170, 0
  %v298 = vsel %vm218, %v171, 0
  %v301 = vsel %vm218, %v172, 0
  %v304 = vsel %vm218, %v173, 0
  %v307 = vsel %vm218, %v174, 0
  %v310 = vsel %vm218, %v175, 0
  %v313 = vsel %vm218, %v176, 0
  %v316 = vsel %vm218, %v177, 0
  %v319 = vsel %vm218, %v178, 0
  %v322 = vsel %vm218, %v179, 0
  %v325 = vsel %vm218, %v180, 0
  %v328 = vsel %vm218, %v181, 0
  %v331 = vsel %vm218, %v182, 0
  %v334 = vsel %vm218, %v183, 0
  %v337 = vsel %vm218, %v184, 0
  %v340 = vsel %vm218, %v185, 0
  %v343 = vsel %vm218, %v186, 0
  %v346 = vsel %vm218, %v187, 0
  %v349 = vsel %vm218, %v188, 0
  %v352 = vsel %vm218, %v189, 0
  %v355 = vsel %vm218, %v190, 0
  %v358 = vsel %vm218, %v191, 0
  %v361 = vsel %vm218, %v192, 0
  %v364 = vsel %vm218, %v193, 0
  %v367 = vsel %vm218, %v194, 0
  %v370 = vsel %vm218, %v195, 0
  %v373 = vsel %vm218, %v196, 0
  %v376 = vsel %vm218, %v197, 0
  %v379 = vsel %vm218, %v198, 0
  %v382 = vsel %vm218, %v199, 0
  %v385 = vsel %vm218, %v200, 0
  %v388 = vsel %vm218, %v201, 0
  %v391 = vsel %vm218, %v202, 0
  %v394 = vsel %vm218, %v203, 0
  %v397 = vsel %vm218, %v204, 0
  %v400 = vsel %vm218, %v205, 0
  %v403 = vsel %vm218, %v206, 0
  %v406 = vsel %vm218, %v207, 0
  %v409 = vsel %vm218, %v208, 0
  %411 = vmatprep.subr.mxu0 0.0
  %412 = vmatpush1.msra.mxu0 %v209
  %413 = vmatprep.subr.mxu0 0.0
  %414 = vmatpush1.msra.mxu0 %v210
  %415 = vmatprep.subr.mxu0 0.0
  %416 = vmatpush1.msra.mxu0 %v211
  %417 = vmatprep.subr.mxu0 0.0
  %418 = vmatpush1.msra.mxu0 %v212
  %419 = vmatprep.subr.mxu0 0.0
  %420 = vmatpush1.msra.mxu0 %v213
  %421 = vmatprep.subr.mxu0 0.0
  %422 = vmatpush1.msra.mxu0 %v214
  %423 = vmatprep.subr.mxu0 0.0
  %424 = vmatpush1.msra.mxu0 %v215
  %425 = vmatprep.subr.mxu0 0.0
  %426 = vmatpush1.msra.mxu0 %v216
  %427 = vmatprep.subr.mxu0 0.0
  %428 = vmatpush1.msra.mxu0 %v217
  %429 = vmatprep.subr.mxu0 0.0
  %430 = vmatpush1.msra.mxu0 0.0
  %431 = vmatprep.subr.mxu0 0.0
  %432 = vmatpush1.msra.mxu0 0.0
  %433 = vmatprep.subr.mxu0 0.0
  %434 = vmatpush1.msra.mxu0 0.0
  %435 = vmatprep.subr.mxu0 0.0
  %436 = vmatpush1.msra.mxu0 0.0
  %437 = vmatprep.subr.mxu0 0.0
  %438 = vmatpush1.msra.mxu0 0.0
  %439 = vmatprep.subr.mxu0 0.0
  %440 = vmatpush1.msra.mxu0 0.0
  %441 = vmatprep.subr.mxu0 0.0
  %442 = vmatpush1.msra.mxu0 0.0
  %443 = vmatprep.subr.mxu0 0.0
  %444 = vmatpush1.msra.mxu0 0.0
  %445 = vmatprep.subr.mxu0 0.0
  %446 = vmatpush1.msra.mxu0 0.0
  %447 = vmatprep.subr.mxu0 0.0
  %448 = vmatpush1.msra.mxu0 0.0
  %449 = vmatprep.subr.mxu0 0.0
  %450 = vmatpush1.msra.mxu0 0.0
  %451 = vmatprep.subr.mxu0 0.0
  %452 = vmatpush1.msra.mxu0 0.0
  %453 = vmatprep.subr.mxu0 0.0
  %454 = vmatpush1.msra.mxu0 0.0
  %455 = vmatprep.subr.mxu0 0.0
  %456 = vmatpush1.msra.mxu0 0.0
  %457 = vmatprep.subr.mxu0 0.0
  %458 = vmatpush1.msra.mxu0 0.0
  %459 = vmatprep.subr.mxu0 0.0
  %460 = vmatpush1.msra.mxu0 0.0
  %461 = vmatprep.subr.mxu0 0.0
  %462 = vmatpush1.msra.mxu0 0.0
  %463 = vmatprep.subr.mxu0 0.0
  %464 = vmatpush1.msra.mxu0 0.0
  %465 = vmatprep.subr.mxu0 0.0
  %466 = vmatpush1.msra.mxu0 0.0
  %467 = vmatprep.subr.mxu0 0.0
  %468 = vmatpush1.msra.mxu0 0.0
  %469 = vmatprep.subr.mxu0 0.0
  %470 = vmatpush1.msra.mxu0 0.0
  %471 = vmatprep.subr.mxu0 0.0
  %472 = vmatpush1.msra.mxu0 0.0
  %473 = vmatprep.subr.mxu0 0.0
  %474 = vmatpush1.msra.mxu0 0.0
  %475 = vmatprep.mubr.f32.mxu0 0.0
  %476 = vmatmul.mubr.f32.gmra.mrb[0].mxu0 %v220
  %v477 = vpop.f32.mrb[0].mxu0
  %v478 = vadd.f32 0.0, %v477
  %v479 = vpop.f32.mrb[0].mxu0
  %480 = vmatprep.mubr.f32.mxu0 0.0
  %481 = vmatmul.mubr.f32.gmra.mrb[0].mxu0 %v223
  %v482 = vpop.f32.mrb[0].mxu0
  %v483 = vadd.f32 0.0, %v482
  %v484 = vpop.f32.mrb[0].mxu0
  %485 = vmatprep.mubr.f32.mxu0 0.0
  %486 = vmatmul.mubr.f32.gmra.mrb[0].mxu0 %v226
  %v487 = vpop.f32.mrb[0].mxu0
  %v488 = vadd.f32 0.0, %v487
  %v489 = vpop.f32.mrb[0].mxu0
  %490 = vmatprep.mubr.f32.mxu0 0.0
  %491 = vmatmul.mubr.f32.gmra.mrb[0].mxu0 %v229
  %v492 = vpop.f32.mrb[0].mxu0
  %v493 = vadd.f32 0.0, %v492
  %v494 = vpop.f32.mrb[0].mxu0
  %495 = vmatprep.mubr.f32.mxu0 0.0
  %496 = vmatmul.mubr.f32.gmra.mrb[0].mxu0 %v232
  %v497 = vpop.f32.mrb[0].mxu0
  %v498 = vadd.f32 0.0, %v497
  %v499 = vpop.f32.mrb[0].mxu0
  %500 = vmatprep.mubr.f32.mxu0 0.0
  %501 = vmatmul.mubr.f32.gmra.mrb[0].mxu0 %v235
  %v502 = vpop.f32.mrb[0].mxu0
  %v503 = vadd.f32 0.0, %v502
  %v504 = vpop.f32.mrb[0].mxu0
  %505 = vmatprep.mubr.f32.mxu0 0.0
  %506 = vmatmul.mubr.f32.gmra.mrb[0].mxu0 %v238
  %v507 = vpop.f32.mrb[0].mxu0
  %v508 = vadd.f32 0.0, %v507
  %v509 = vpop.f32.mrb[0].mxu0
  %510 = vmatprep.mubr.f32.mxu0 0.0
  %511 = vmatmul.mubr.f32.gmra.mrb[0].mxu0 %v241
  %v512 = vpop.f32.mrb[0].mxu0
  %v513 = vadd.f32 0.0, %v512
  %v514 = vpop.f32.mrb[0].mxu0
  %515 = vmatprep.mubr.f32.mxu0 0.0
  %516 = vmatmul.mubr.f32.gmra.mrb[0].mxu0 %v244
  %v517 = vpop.f32.mrb[0].mxu0
  %v518 = vadd.f32 0.0, %v517
  %v519 = vpop.f32.mrb[0].mxu0
  %520 = vmatprep.mubr.f32.mxu0 0.0
  %521 = vmatmul.mubr.f32.gmra.mrb[0].mxu0 %v247
  %v522 = vpop.f32.mrb[0].mxu0
  %v523 = vadd.f32 0.0, %v522
  %v524 = vpop.f32.mrb[0].mxu0
  %525 = vmatprep.mubr.f32.mxu0 0.0
  %526 = vmatmul.mubr.f32.gmra.mrb[0].mxu0 %v250
  %v527 = vpop.f32.mrb[0].mxu0
  %v528 = vadd.f32 0.0, %v527
  %v529 = vpop.f32.mrb[0].mxu0
  %530 = vmatprep.mubr.f32.mxu0 0.0
  %531 = vmatmul.mubr.f32.gmra.mrb[0].mxu0 %v253
  %v532 = vpop.f32.mrb[0].mxu0
  %v533 = vadd.f32 0.0, %v532
  %v534 = vpop.f32.mrb[0].mxu0
  %535 = vmatprep.mubr.f32.mxu0 0.0
  %536 = vmatmul.mubr.f32.gmra.mrb[0].mxu0 %v256
  %v537 = vpop.f32.mrb[0].mxu0
  %v538 = vadd.f32 0.0, %v537
  %v539 = vpop.f32.mrb[0].mxu0
  %540 = vmatprep.mubr.f32.mxu0 0.0
  %541 = vmatmul.mubr.f32.gmra.mrb[0].mxu0 %v259
  %v542 = vpop.f32.mrb[0].mxu0
  %v543 = vadd.f32 0.0, %v542
  %v544 = vpop.f32.mrb[0].mxu0
  %545 = vmatprep.mubr.f32.mxu0 0.0
  %546 = vmatmul.mubr.f32.gmra.mrb[0].mxu0 %v262
  %v547 = vpop.f32.mrb[0].mxu0
  %v548 = vadd.f32 0.0, %v547
  %v549 = vpop.f32.mrb[0].mxu0
  %550 = vmatprep.mubr.f32.mxu0 0.0
  %551 = vmatmul.mubr.f32.gmra.mrb[0].mxu0 %v265
  %v552 = vpop.f32.mrb[0].mxu0
  %v553 = vadd.f32 0.0, %v552
  %v554 = vpop.f32.mrb[0].mxu0
  %555 = vmatprep.mubr.f32.mxu0 0.0
  %556 = vmatmul.mubr.f32.gmra.mrb[0].mxu0 %v268
  %v557 = vpop.f32.mrb[0].mxu0
  %v558 = vadd.f32 0.0, %v557
  %v559 = vpop.f32.mrb[0].mxu0
  %560 = vmatprep.mubr.f32.mxu0 0.0
  %561 = vmatmul.mubr.f32.gmra.mrb[0].mxu0 %v271
  %v562 = vpop.f32.mrb[0].mxu0
  %v563 = vadd.f32 0.0, %v562
  %v564 = vpop.f32.mrb[0].mxu0
  %565 = vmatprep.mubr.f32.mxu0 0.0
  %566 = vmatmul.mubr.f32.gmra.mrb[0].mxu0 %v274
  %v567 = vpop.f32.mrb[0].mxu0
  %v568 = vadd.f32 0.0, %v567
  %v569 = vpop.f32.mrb[0].mxu0
  %570 = vmatprep.mubr.f32.mxu0 0.0
  %571 = vmatmul.mubr.f32.gmra.mrb[0].mxu0 %v277
  %v572 = vpop.f32.mrb[0].mxu0
  %v573 = vadd.f32 0.0, %v572
  %v574 = vpop.f32.mrb[0].mxu0
  %575 = vmatprep.mubr.f32.mxu0 0.0
  %576 = vmatmul.mubr.f32.gmra.mrb[0].mxu0 %v280
  %v577 = vpop.f32.mrb[0].mxu0
  %v578 = vadd.f32 0.0, %v577
  %v579 = vpop.f32.mrb[0].mxu0
  %580 = vmatprep.mubr.f32.mxu0 0.0
  %581 = vmatmul.mubr.f32.gmra.mrb[0].mxu0 %v283
  %v582 = vpop.f32.mrb[0].mxu0
  %v583 = vadd.f32 0.0, %v582
  %v584 = vpop.f32.mrb[0].mxu0
  %585 = vmatprep.mubr.f32.mxu0 0.0
  %586 = vmatmul.mubr.f32.gmra.mrb[0].mxu0 %v286
  %v587 = vpop.f32.mrb[0].mxu0
  %v588 = vadd.f32 0.0, %v587
  %v589 = vpop.f32.mrb[0].mxu0
  %590 = vmatprep.mubr.f32.mxu0 0.0
  %591 = vmatmul.mubr.f32.gmra.mrb[0].mxu0 %v289
  %v592 = vpop.f32.mrb[0].mxu0
  %v593 = vadd.f32 0.0, %v592
  %v594 = vpop.f32.mrb[0].mxu0
  %595 = vmatprep.mubr.f32.mxu0 0.0
  %596 = vmatmul.mubr.f32.gmra.mrb[0].mxu0 %v292
  %v597 = vpop.f32.mrb[0].mxu0
  %v598 = vadd.f32 0.0, %v597
  %v599 = vpop.f32.mrb[0].mxu0
  %600 = vmatprep.mubr.f32.mxu0 0.0
  %601 = vmatmul.mubr.f32.gmra.mrb[0].mxu0 %v295
  %v602 = vpop.f32.mrb[0].mxu0
  %v603 = vadd.f32 0.0, %v602
  %v604 = vpop.f32.mrb[0].mxu0
  %605 = vmatprep.mubr.f32.mxu0 0.0
  %606 = vmatmul.mubr.f32.gmra.mrb[0].mxu0 %v298
  %v607 = vpop.f32.mrb[0].mxu0
  %v608 = vadd.f32 0.0, %v607
  %v609 = vpop.f32.mrb[0].mxu0
  %610 = vmatprep.mubr.f32.mxu0 0.0
  %611 = vmatmul.mubr.f32.gmra.mrb[0].mxu0 %v301
  %v612 = vpop.f32.mrb[0].mxu0
  %v613 = vadd.f32 0.0, %v612
  %v614 = vpop.f32.mrb[0].mxu0
  %615 = vmatprep.mubr.f32.mxu0 0.0
  %616 = vmatmul.mubr.f32.gmra.mrb[0].mxu0 %v304
  %v617 = vpop.f32.mrb[0].mxu0
  %v618 = vadd.f32 0.0, %v617
  %v619 = vpop.f32.mrb[0].mxu0
  %620 = vmatprep.mubr.f32.mxu0 0.0
  %621 = vmatmul.mubr.f32.gmra.mrb[0].mxu0 %v307
  %v622 = vpop.f32.mrb[0].mxu0
  %v623 = vadd.f32 0.0, %v622
  %v624 = vpop.f32.mrb[0].mxu0
  %625 = vmatprep.mubr.f32.mxu0 0.0
  %626 = vmatmul.mubr.f32.gmra.mrb[0].mxu0 %v310
  %v627 = vpop.f32.mrb[0].mxu0
  %v628 = vadd.f32 0.0, %v627
  %v629 = vpop.f32.mrb[0].mxu0
  %630 = vmatprep.mubr.f32.mxu0 0.0
  %631 = vmatmul.mubr.f32.gmra.mrb[0].mxu0 %v313
  %v632 = vpop.f32.mrb[0].mxu0
  %v633 = vadd.f32 0.0, %v632
  %v634 = vpop.f32.mrb[0].mxu0
  %635 = vmatprep.mubr.f32.mxu0 0.0
  %636 = vmatmul.mubr.f32.gmra.mrb[0].mxu0 %v316
  %v637 = vpop.f32.mrb[0].mxu0
  %v638 = vadd.f32 0.0, %v637
  %v639 = vpop.f32.mrb[0].mxu0
  %640 = vmatprep.mubr.f32.mxu0 0.0
  %641 = vmatmul.mubr.f32.gmra.mrb[0].mxu0 %v319
  %v642 = vpop.f32.mrb[0].mxu0
  %v643 = vadd.f32 0.0, %v642
  %v644 = vpop.f32.mrb[0].mxu0
  %645 = vmatprep.mubr.f32.mxu0 0.0
  %646 = vmatmul.mubr.f32.gmra.mrb[0].mxu0 %v322
  %v647 = vpop.f32.mrb[0].mxu0
  %v648 = vadd.f32 0.0, %v647
  %v649 = vpop.f32.mrb[0].mxu0
  %650 = vmatprep.mubr.f32.mxu0 0.0
  %651 = vmatmul.mubr.f32.gmra.mrb[0].mxu0 %v325
  %v652 = vpop.f32.mrb[0].mxu0
  %v653 = vadd.f32 0.0, %v652
  %v654 = vpop.f32.mrb[0].mxu0
  %655 = vmatprep.mubr.f32.mxu0 0.0
  %656 = vmatmul.mubr.f32.gmra.mrb[0].mxu0 %v328
  %v657 = vpop.f32.mrb[0].mxu0
  %v658 = vadd.f32 0.0, %v657
  %v659 = vpop.f32.mrb[0].mxu0
  %660 = vmatprep.mubr.f32.mxu0 0.0
  %661 = vmatmul.mubr.f32.gmra.mrb[0].mxu0 %v331
  %v662 = vpop.f32.mrb[0].mxu0
  %v663 = vadd.f32 0.0, %v662
  %v664 = vpop.f32.mrb[0].mxu0
  %665 = vmatprep.mubr.f32.mxu0 0.0
  %666 = vmatmul.mubr.f32.gmra.mrb[0].mxu0 %v334
  %v667 = vpop.f32.mrb[0].mxu0
  %v668 = vadd.f32 0.0, %v667
  %v669 = vpop.f32.mrb[0].mxu0
  %670 = vmatprep.mubr.f32.mxu0 0.0
  %671 = vmatmul.mubr.f32.gmra.mrb[0].mxu0 %v337
  %v672 = vpop.f32.mrb[0].mxu0
  %v673 = vadd.f32 0.0, %v672
  %v674 = vpop.f32.mrb[0].mxu0
  %675 = vmatprep.mubr.f32.mxu0 0.0
  %676 = vmatmul.mubr.f32.gmra.mrb[0].mxu0 %v340
  %v677 = vpop.f32.mrb[0].mxu0
  %v678 = vadd.f32 0.0, %v677
  %v679 = vpop.f32.mrb[0].mxu0
  %680 = vmatprep.mubr.f32.mxu0 0.0
  %681 = vmatmul.mubr.f32.gmra.mrb[0].mxu0 %v343
  %v682 = vpop.f32.mrb[0].mxu0
  %v683 = vadd.f32 0.0, %v682
  %v684 = vpop.f32.mrb[0].mxu0
  %685 = vmatprep.mubr.f32.mxu0 0.0
  %686 = vmatmul.mubr.f32.gmra.mrb[0].mxu0 %v346
  %v687 = vpop.f32.mrb[0].mxu0
  %v688 = vadd.f32 0.0, %v687
  %v689 = vpop.f32.mrb[0].mxu0
  %690 = vmatprep.mubr.f32.mxu0 0.0
  %691 = vmatmul.mubr.f32.gmra.mrb[0].mxu0 %v349
  %v692 = vpop.f32.mrb[0].mxu0
  %v693 = vadd.f32 0.0, %v692
  %v694 = vpop.f32.mrb[0].mxu0
  %695 = vmatprep.mubr.f32.mxu0 0.0
  %696 = vmatmul.mubr.f32.gmra.mrb[0].mxu0 %v352
  %v697 = vpop.f32.mrb[0].mxu0
  %v698 = vadd.f32 0.0, %v697
  %v699 = vpop.f32.mrb[0].mxu0
  %700 = vmatprep.mubr.f32.mxu0 0.0
  %701 = vmatmul.mubr.f32.gmra.mrb[0].mxu0 %v355
  %v702 = vpop.f32.mrb[0].mxu0
  %v703 = vadd.f32 0.0, %v702
  %v704 = vpop.f32.mrb[0].mxu0
  %705 = vmatprep.mubr.f32.mxu0 0.0
  %706 = vmatmul.mubr.f32.gmra.mrb[0].mxu0 %v358
  %v707 = vpop.f32.mrb[0].mxu0
  %v708 = vadd.f32 0.0, %v707
  %v709 = vpop.f32.mrb[0].mxu0
  %710 = vmatprep.mubr.f32.mxu0 0.0
  %711 = vmatmul.mubr.f32.gmra.mrb[0].mxu0 %v361
  %v712 = vpop.f32.mrb[0].mxu0
  %v713 = vadd.f32 0.0, %v712
  %v714 = vpop.f32.mrb[0].mxu0
  %715 = vmatprep.mubr.f32.mxu0 0.0
  %716 = vmatmul.mubr.f32.gmra.mrb[0].mxu0 %v364
  %v717 = vpop.f32.mrb[0].mxu0
  %v718 = vadd.f32 0.0, %v717
  %v719 = vpop.f32.mrb[0].mxu0
  %720 = vmatprep.mubr.f32.mxu0 0.0
  %721 = vmatmul.mubr.f32.gmra.mrb[0].mxu0 %v367
  %v722 = vpop.f32.mrb[0].mxu0
  %v723 = vadd.f32 0.0, %v722
  %v724 = vpop.f32.mrb[0].mxu0
  %725 = vmatprep.mubr.f32.mxu0 0.0
  %726 = vmatmul.mubr.f32.gmra.mrb[0].mxu0 %v370
  %v727 = vpop.f32.mrb[0].mxu0
  %v728 = vadd.f32 0.0, %v727
  %v729 = vpop.f32.mrb[0].mxu0
  %730 = vmatprep.mubr.f32.mxu0 0.0
  %731 = vmatmul.mubr.f32.gmra.mrb[0].mxu0 %v373
  %v732 = vpop.f32.mrb[0].mxu0
  %v733 = vadd.f32 0.0, %v732
  %v734 = vpop.f32.mrb[0].mxu0
  %735 = vmatprep.mubr.f32.mxu0 0.0
  %736 = vmatmul.mubr.f32.gmra.mrb[0].mxu0 %v376
  %v737 = vpop.f32.mrb[0].mxu0
  %v738 = vadd.f32 0.0, %v737
  %v739 = vpop.f32.mrb[0].mxu0
  %740 = vmatprep.mubr.f32.mxu0 0.0
  %741 = vmatmul.mubr.f32.gmra.mrb[0].mxu0 %v379
  %v742 = vpop.f32.mrb[0].mxu0
  %v743 = vadd.f32 0.0, %v742
  %v744 = vpop.f32.mrb[0].mxu0
  %745 = vmatprep.mubr.f32.mxu0 0.0
  %746 = vmatmul.mubr.f32.gmra.mrb[0].mxu0 %v382
  %v747 = vpop.f32.mrb[0].mxu0
  %v748 = vadd.f32 0.0, %v747
  %v749 = vpop.f32.mrb[0].mxu0
  %750 = vmatprep.mubr.f32.mxu0 0.0
  %751 = vmatmul.mubr.f32.gmra.mrb[0].mxu0 %v385
  %v752 = vpop.f32.mrb[0].mxu0
  %v753 = vadd.f32 0.0, %v752
  %v754 = vpop.f32.mrb[0].mxu0
  %755 = vmatprep.mubr.f32.mxu0 0.0
  %756 = vmatmul.mubr.f32.gmra.mrb[0].mxu0 %v388
  %v757 = vpop.f32.mrb[0].mxu0
  %v758 = vadd.f32 0.0, %v757
  %v759 = vpop.f32.mrb[0].mxu0
  %760 = vmatprep.mubr.f32.mxu0 0.0
  %761 = vmatmul.mubr.f32.gmra.mrb[0].mxu0 %v391
  %v762 = vpop.f32.mrb[0].mxu0
  %v763 = vadd.f32 0.0, %v762
  %v764 = vpop.f32.mrb[0].mxu0
  %765 = vmatprep.mubr.f32.mxu0 0.0
  %766 = vmatmul.mubr.f32.gmra.mrb[0].mxu0 %v394
  %v767 = vpop.f32.mrb[0].mxu0
  %v768 = vadd.f32 0.0, %v767
  %v769 = vpop.f32.mrb[0].mxu0
  %770 = vmatprep.mubr.f32.mxu0 0.0
  %771 = vmatmul.mubr.f32.gmra.mrb[0].mxu0 %v397
  %v772 = vpop.f32.mrb[0].mxu0
  %v773 = vadd.f32 0.0, %v772
  %v774 = vpop.f32.mrb[0].mxu0
  %775 = vmatprep.mubr.f32.mxu0 0.0
  %776 = vmatmul.mubr.f32.gmra.mrb[0].mxu0 %v400
  %v777 = vpop.f32.mrb[0].mxu0
  %v778 = vadd.f32 0.0, %v777
  %v779 = vpop.f32.mrb[0].mxu0
  %780 = vmatprep.mubr.f32.mxu0 0.0
  %781 = vmatmul.mubr.f32.gmra.mrb[0].mxu0 %v403
  %v782 = vpop.f32.mrb[0].mxu0
  %v783 = vadd.f32 0.0, %v782
  %v784 = vpop.f32.mrb[0].mxu0
  %785 = vmatprep.mubr.f32.mxu0 0.0
  %786 = vmatmul.mubr.f32.gmra.mrb[0].mxu0 %v406
  %v787 = vpop.f32.mrb[0].mxu0
  %v788 = vadd.f32 0.0, %v787
  %v789 = vpop.f32.mrb[0].mxu0
  %790 = vmatprep.mubr.f32.mxu0 0.0
  %791 = vmatmul.mubr.f32.gmra.mrb[0].mxu0 %v409
  %v792 = vpop.f32.mrb[0].mxu0
  %v793 = vadd.f32 0.0, %v792
  %v794 = vpop.f32.mrb[0].mxu0
  %795 = vdwg.mxu0
  %v796 = vadd.f32 %v81, %v478
  %v797 = vadd.f32 %v82, %v483
  %v798 = vadd.f32 %v83, %v488
  %v799 = vadd.f32 %v84, %v493
  %v800 = vadd.f32 %v85, %v498
  %v801 = vadd.f32 %v86, %v503
  %v802 = vadd.f32 %v87, %v508
  %v803 = vadd.f32 %v88, %v513
  %v804 = vadd.f32 %v89, %v518
  %v805 = vadd.f32 %v90, %v523
  %v806 = vadd.f32 %v91, %v528
  %v807 = vadd.f32 %v92, %v533
  %v808 = vadd.f32 %v93, %v538
  %v809 = vadd.f32 %v94, %v543
  %v810 = vadd.f32 %v95, %v548
  %v811 = vadd.f32 %v96, %v553
  %v812 = vadd.f32 %v97, %v558
  %v813 = vadd.f32 %v98, %v563
  %v814 = vadd.f32 %v99, %v568
  %v815 = vadd.f32 %v100, %v573
  %v816 = vadd.f32 %v101, %v578
  %v817 = vadd.f32 %v102, %v583
  %v818 = vadd.f32 %v103, %v588
  %v819 = vadd.f32 %v104, %v593
  %v820 = vadd.f32 %v105, %v598
  %v821 = vadd.f32 %v106, %v603
  %v822 = vadd.f32 %v107, %v608
  %v823 = vadd.f32 %v108, %v613
  %v824 = vadd.f32 %v109, %v618
  %v825 = vadd.f32 %v110, %v623
  %v826 = vadd.f32 %v111, %v628
  %v827 = vadd.f32 %v112, %v633
  %v828 = vadd.f32 %v113, %v638
  %v829 = vadd.f32 %v114, %v643
  %v830 = vadd.f32 %v115, %v648
  %v831 = vadd.f32 %v116, %v653
  %v832 = vadd.f32 %v117, %v658
  %v833 = vadd.f32 %v118, %v663
  %v834 = vadd.f32 %v119, %v668
  %v835 = vadd.f32 %v120, %v673
  %v836 = vadd.f32 %v121, %v678
  %v837 = vadd.f32 %v122, %v683
  %v838 = vadd.f32 %v123, %v688
  %v839 = vadd.f32 %v124, %v693
  %v840 = vadd.f32 %v125, %v698
  %v841 = vadd.f32 %v126, %v703
  %v842 = vadd.f32 %v127, %v708
  %v843 = vadd.f32 %v128, %v713
  %v844 = vadd.f32 %v129, %v718
  %v845 = vadd.f32 %v130, %v723
  %v846 = vadd.f32 %v131, %v728
  %v847 = vadd.f32 %v132, %v733
  %v848 = vadd.f32 %v133, %v738
  %v849 = vadd.f32 %v134, %v743
  %v850 = vadd.f32 %v135, %v748
  %v851 = vadd.f32 %v136, %v753
  %v852 = vadd.f32 %v137, %v758
  %v853 = vadd.f32 %v138, %v763
  %v854 = vadd.f32 %v139, %v768
  %v855 = vadd.f32 %v140, %v773
  %v856 = vadd.f32 %v141, %v778
  %v857 = vadd.f32 %v142, %v783
  %v858 = vadd.f32 %v143, %v788
  %v859 = vadd.f32 %v144, %v793
  %860 = vst [vmem:[#allocation2] sm:$0xff] %v796
  %861 = vst [vmem:[#allocation2 + $0x8] sm:$0xff] %v797
  %862 = vst [vmem:[#allocation2 + $0x10] sm:$0xff] %v798
  %863 = vst [vmem:[#allocation2 + $0x18] sm:$0xff] %v799
  %864 = vst [vmem:[#allocation2 + $0x20] sm:$0xff] %v800
  %865 = vst [vmem:[#allocation2 + $0x28] sm:$0xff] %v801
  %866 = vst [vmem:[#allocation2 + $0x30] sm:$0xff] %v802
  %867 = vst [vmem:[#allocation2 + $0x38] sm:$0xff] %v803
  %868 = vst [vmem:[#allocation2 + $0x40] sm:$0xff] %v804
  %869 = vst [vmem:[#allocation2 + $0x48] sm:$0xff] %v805
  %870 = vst [vmem:[#allocation2 + $0x50] sm:$0xff] %v806
  %871 = vst [vmem:[#allocation2 + $0x58] sm:$0xff] %v807
  %872 = vst [vmem:[#allocation2 + $0x60] sm:$0xff] %v808
  %873 = vst [vmem:[#allocation2 + $0x68] sm:$0xff] %v809
  %874 = vst [vmem:[#allocation2 + $0x70] sm:$0xff] %v810
  %875 = vst [vmem:[#allocation2 + $0x78] sm:$0xff] %v811
  %876 = vst [vmem:[#allocation2 + $0x80] sm:$0xff] %v812
  %877 = vst [vmem:[#allocation2 + $0x88] sm:$0xff] %v813
  %878 = vst [vmem:[#allocation2 + $0x90] sm:$0xff] %v814
  %879 = vst [vmem:[#allocation2 + $0x98] sm:$0xff] %v815
  %880 = vst [vmem:[#allocation2 + $0xa0] sm:$0xff] %v816
  %881 = vst [vmem:[#allocation2 + $0xa8] sm:$0xff] %v817
  %882 = vst [vmem:[#allocation2 + $0xb0] sm:$0xff] %v818
  %883 = vst [vmem:[#allocation2 + $0xb8] sm:$0xff] %v819
  %884 = vst [vmem:[#allocation2 + $0xc0] sm:$0xff] %v820
  %885 = vst [vmem:[#allocation2 + $0xc8] sm:$0xff] %v821
  %886 = vst [vmem:[#allocation2 + $0xd0] sm:$0xff] %v822
  %887 = vst [vmem:[#allocation2 + $0xd8] sm:$0xff] %v823
  %888 = vst [vmem:[#allocation2 + $0xe0] sm:$0xff] %v824
  %889 = vst [vmem:[#allocation2 + $0xe8] sm:$0xff] %v825
  %890 = vst [vmem:[#allocation2 + $0xf0] sm:$0xff] %v826
  %891 = vst [vmem:[#allocation2 + $0xf8] sm:$0xff] %v827
  %892 = vst [vmem:[#allocation2 + $0x100] sm:$0xff] %v828
  %893 = vst [vmem:[#allocation2 + $0x108] sm:$0xff] %v829
  %894 = vst [vmem:[#allocation2 + $0x110] sm:$0xff] %v830
  %895 = vst [vmem:[#allocation2 + $0x118] sm:$0xff] %v831
  %896 = vst [vmem:[#allocation2 + $0x120] sm:$0xff] %v832
  %897 = vst [vmem:[#allocation2 + $0x128] sm:$0xff] %v833
  %898 = vst [vmem:[#allocation2 + $0x130] sm:$0xff] %v834
  %899 = vst [vmem:[#allocation2 + $0x138] sm:$0xff] %v835
  %900 = vst [vmem:[#allocation2 + $0x140] sm:$0xff] %v836
  %901 = vst [vmem:[#allocation2 + $0x148] sm:$0xff] %v837
  %902 = vst [vmem:[#allocation2 + $0x150] sm:$0xff] %v838
  %903 = vst [vmem:[#allocation2 + $0x158] sm:$0xff] %v839
  %904 = vst [vmem:[#allocation2 + $0x160] sm:$0xff] %v840
  %905 = vst [vmem:[#allocation2 + $0x168] sm:$0xff] %v841
  %906 = vst [vmem:[#allocation2 + $0x170] sm:$0xff] %v842
  %907 = vst [vmem:[#allocation2 + $0x178] sm:$0xff] %v843
  %908 = vst [vmem:[#allocation2 + $0x180] sm:$0xff] %v844
  %909 = vst [vmem:[#allocation2 + $0x188] sm:$0xff] %v845
  %910 = vst [vmem:[#allocation2 + $0x190] sm:$0xff] %v846
  %911 = vst [vmem:[#allocation2 + $0x198] sm:$0xff] %v847
  %912 = vst [vmem:[#allocation2 + $0x1a0] sm:$0xff] %v848
  %913 = vst [vmem:[#allocation2 + $0x1a8] sm:$0xff] %v849
  %914 = vst [vmem:[#allocation2 + $0x1b0] sm:$0xff] %v850
  %915 = vst [vmem:[#allocation2 + $0x1b8] sm:$0xff] %v851
  %916 = vst [vmem:[#allocation2 + $0x1c0] sm:$0xff] %v852
  %917 = vst [vmem:[#allocation2 + $0x1c8] sm:$0xff] %v853
  %918 = vst [vmem:[#allocation2 + $0x1d0] sm:$0xff] %v854
  %919 = vst [vmem:[#allocation2 + $0x1d8] sm:$0xff] %v855
  %920 = vst [vmem:[#allocation2 + $0x1e0] sm:$0xff] %v856
  %921 = vst [vmem:[#allocation2 + $0x1e8] sm:$0xff] %v857
  %922 = vst [vmem:[#allocation2 + $0x1f0] sm:$0xff] %v858
  %923 = vst [vmem:[#allocation2 + $0x1f8] sm:$0xff] %v859
  // Predicated region
  $region14: #{conv2d_batchnorm_relu.2} parent=0 // pred_check
    %p924 = pneg %p13
  $region15: #{conv2d_batchnorm_relu.2} parent=0 // pred_check_branch
    %926 = sbr.rel (%p924) target = $region17
  $region16: #{conv2d_batchnorm_relu.2} parent=0 // pred_region
    %v927 = vld [vmem:[#allocation2] sm:$0xff]
    %v928 = vld [vmem:[#allocation2 + $0x8] sm:$0xff]
    %v929 = vld [vmem:[#allocation2 + $0x10] sm:$0xff]
    %v930 = vld [vmem:[#allocation2 + $0x18] sm:$0xff]
    %v931 = vld [vmem:[#allocation2 + $0x20] sm:$0xff]
    %v932 = vld [vmem:[#allocation2 + $0x28] sm:$0xff]
    %v933 = vld [vmem:[#allocation2 + $0x30] sm:$0xff]
    %v934 = vld [vmem:[#allocation2 + $0x38] sm:$0xff]
    %v935 = vld [vmem:[#allocation2 + $0x40] sm:$0xff]
    %v936 = vld [vmem:[#allocation2 + $0x48] sm:$0xff]
    %v937 = vld [vmem:[#allocation2 + $0x50] sm:$0xff]
    %v938 = vld [vmem:[#allocation2 + $0x58] sm:$0xff]
    %v939 = vld [vmem:[#allocation2 + $0x60] sm:$0xff]
    %v940 = vld [vmem:[#allocation2 + $0x68] sm:$0xff]
    %v941 = vld [vmem:[#allocation2 + $0x70] sm:$0xff]
    %v942 = vld [vmem:[#allocation2 + $0x78] sm:$0xff]
    %v943 = vld [vmem:[#allocation2 + $0x80] sm:$0xff]
    %v944 = vld [vmem:[#allocation2 + $0x88] sm:$0xff]
    %v945 = vld [vmem:[#allocation2 + $0x90] sm:$0xff]
    %v946 = vld [vmem:[#allocation2 + $0x98] sm:$0xff]
    %v947 = vld [vmem:[#allocation2 + $0xa0] sm:$0xff]
    %v948 = vld [vmem:[#allocation2 + $0xa8] sm:$0xff]
    %v949 = vld [vmem:[#allocation2 + $0xb0] sm:$0xff]
    %v950 = vld [vmem:[#allocation2 + $0xb8] sm:$0xff]
    %v951 = vld [vmem:[#allocation2 + $0xc0] sm:$0xff]
    %v952 = vld [vmem:[#allocation2 + $0xc8] sm:$0xff]
    %v953 = vld [vmem:[#allocation2 + $0xd0] sm:$0xff]
    %v954 = vld [vmem:[#allocation2 + $0xd8] sm:$0xff]
    %v955 = vld [vmem:[#allocation2 + $0xe0] sm:$0xff]
    %v956 = vld [vmem:[#allocation2 + $0xe8] sm:$0xff]
    %v957 = vld [vmem:[#allocation2 + $0xf0] sm:$0xff]
    %v958 = vld [vmem:[#allocation2 + $0xf8] sm:$0xff]
    %v959 = vld [vmem:[#allocation2 + $0x100] sm:$0xff]
    %v960 = vld [vmem:[#allocation2 + $0x108] sm:$0xff]
    %v961 = vld [vmem:[#allocation2 + $0x110] sm:$0xff]
    %v962 = vld [vmem:[#allocation2 + $0x118] sm:$0xff]
    %v963 = vld [vmem:[#allocation2 + $0x120] sm:$0xff]
    %v964 = vld [vmem:[#allocation2 + $0x128] sm:$0xff]
    %v965 = vld [vmem:[#allocation2 + $0x130] sm:$0xff]
    %v966 = vld [vmem:[#allocation2 + $0x138] sm:$0xff]
    %v967 = vld [vmem:[#allocation2 + $0x140] sm:$0xff]
    %v968 = vld [vmem:[#allocation2 + $0x148] sm:$0xff]
    %v969 = vld [vmem:[#allocation2 + $0x150] sm:$0xff]
    %v970 = vld [vmem:[#allocation2 + $0x158] sm:$0xff]
    %v971 = vld [vmem:[#allocation2 + $0x160] sm:$0xff]
    %v972 = vld [vmem:[#allocation2 + $0x168] sm:$0xff]
    %v973 = vld [vmem:[#allocation2 + $0x170] sm:$0xff]
    %v974 = vld [vmem:[#allocation2 + $0x178] sm:$0xff]
    %v975 = vld [vmem:[#allocation2 + $0x180] sm:$0xff]
    %v976 = vld [vmem:[#allocation2 + $0x188] sm:$0xff]
    %v977 = vld [vmem:[#allocation2 + $0x190] sm:$0xff]
    %v978 = vld [vmem:[#allocation2 + $0x198] sm:$0xff]
    %v979 = vld [vmem:[#allocation2 + $0x1a0] sm:$0xff]
    %v980 = vld [vmem:[#allocation2 + $0x1a8] sm:$0xff]
    %v981 = vld [vmem:[#allocation2 + $0x1b0] sm:$0xff]
    %v982 = vld [vmem:[#allocation2 + $0x1b8] sm:$0xff]
    %v983 = vld [vmem:[#allocation2 + $0x1c0] sm:$0xff]
    %v984 = vld [vmem:[#allocation2 + $0x1c8] sm:$0xff]
    %v985 = vld [vmem:[#allocation2 + $0x1d0] sm:$0xff]
    %v986 = vld [vmem:[#allocation2 + $0x1d8] sm:$0xff]
    %v987 = vld [vmem:[#allocation2 + $0x1e0] sm:$0xff]
    %v988 = vld [vmem:[#allocation2 + $0x1e8] sm:$0xff]
    %v989 = vld [vmem:[#allocation2 + $0x1f0] sm:$0xff]
    %v990 = vld [vmem:[#allocation2 + $0x1f8] sm:$0xff]
    %991 = vst [vmem:[%s2] sm:$0xff] %v927
    %992 = vst [vmem:[%s2 + $0x8] sm:$0xff] %v928
    %993 = vst [vmem:[%s2 + $0x10] sm:$0xff] %v929
    %994 = vst [vmem:[%s2 + $0x18] sm:$0xff] %v930
    %995 = vst [vmem:[%s2 + $0x20] sm:$0xff] %v931
    %996 = vst [vmem:[%s2 + $0x28] sm:$0xff] %v932
    %997 = vst [vmem:[%s2 + $0x30] sm:$0xff] %v933
    %998 = vst [vmem:[%s2 + $0x38] sm:$0xff] %v934
    %999 = vst [vmem:[%s2 + $0x40] sm:$0xff] %v935
    %1000 = vst [vmem:[%s2 + $0x48] sm:$0xff] %v936
    %1001 = vst [vmem:[%s2 + $0x50] sm:$0xff] %v937
    %1002 = vst [vmem:[%s2 + $0x58] sm:$0xff] %v938
    %1003 = vst [vmem:[%s2 + $0x60] sm:$0xff] %v939
    %1004 = vst [vmem:[%s2 + $0x68] sm:$0xff] %v940
    %1005 = vst [vmem:[%s2 + $0x70] sm:$0xff] %v941
    %1006 = vst [vmem:[%s2 + $0x78] sm:$0xff] %v942
    %1007 = vst [vmem:[%s2 + $0x80] sm:$0xff] %v943
    %1008 = vst [vmem:[%s2 + $0x88] sm:$0xff] %v944
    %1009 = vst [vmem:[%s2 + $0x90] sm:$0xff] %v945
    %1010 = vst [vmem:[%s2 + $0x98] sm:$0xff] %v946
    %1011 = vst [vmem:[%s2 + $0xa0] sm:$0xff] %v947
    %1012 = vst [vmem:[%s2 + $0xa8] sm:$0xff] %v948
    %1013 = vst [vmem:[%s2 + $0xb0] sm:$0xff] %v949
    %1014 = vst [vmem:[%s2 + $0xb8] sm:$0xff] %v950
    %1015 = vst [vmem:[%s2 + $0xc0] sm:$0xff] %v951
    %1016 = vst [vmem:[%s2 + $0xc8] sm:$0xff] %v952
    %1017 = vst [vmem:[%s2 + $0xd0] sm:$0xff] %v953
    %1018 = vst [vmem:[%s2 + $0xd8] sm:$0xff] %v954
    %1019 = vst [vmem:[%s2 + $0xe0] sm:$0xff] %v955
    %1020 = vst [vmem:[%s2 + $0xe8] sm:$0xff] %v956
    %1021 = vst [vmem:[%s2 + $0xf0] sm:$0xff] %v957
    %1022 = vst [vmem:[%s2 + $0xf8] sm:$0xff] %v958
    %1023 = vst [vmem:[%s2 + $0x100] sm:$0xff] %v959
    %1024 = vst [vmem:[%s2 + $0x108] sm:$0xff] %v960
    %1025 = vst [vmem:[%s2 + $0x110] sm:$0xff] %v961
    %1026 = vst [vmem:[%s2 + $0x118] sm:$0xff] %v962
    %1027 = vst [vmem:[%s2 + $0x120] sm:$0xff] %v963
    %1028 = vst [vmem:[%s2 + $0x128] sm:$0xff] %v964
    %1029 = vst [vmem:[%s2 + $0x130] sm:$0xff] %v965
    %1030 = vst [vmem:[%s2 + $0x138] sm:$0xff] %v966
    %1031 = vst [vmem:[%s2 + $0x140] sm:$0xff] %v967
    %1032 = vst [vmem:[%s2 + $0x148] sm:$0xff] %v968
    %1033 = vst [vmem:[%s2 + $0x150] sm:$0xff] %v969
    %1034 = vst [vmem:[%s2 + $0x158] sm:$0xff] %v970
    %1035 = vst [vmem:[%s2 + $0x160] sm:$0xff] %v971
    %1036 = vst [vmem:[%s2 + $0x168] sm:$0xff] %v972
    %1037 = vst [vmem:[%s2 + $0x170] sm:$0xff] %v973
    %1038 = vst [vmem:[%s2 + $0x178] sm:$0xff] %v974
    %1039 = vst [vmem:[%s2 + $0x180] sm:$0xff] %v975
    %1040 = vst [vmem:[%s2 + $0x188] sm:$0xff] %v976
    %1041 = vst [vmem:[%s2 + $0x190] sm:$0xff] %v977
    %1042 = vst [vmem:[%s2 + $0x198] sm:$0xff] %v978
    %1043 = vst [vmem:[%s2 + $0x1a0] sm:$0xff] %v979
    %1044 = vst [vmem:[%s2 + $0x1a8] sm:$0xff] %v980
    %1045 = vst [vmem:[%s2 + $0x1b0] sm:$0xff] %v981
    %1046 = vst [vmem:[%s2 + $0x1b8] sm:$0xff] %v982
    %1047 = vst [vmem:[%s2 + $0x1c0] sm:$0xff] %v983
    %1048 = vst [vmem:[%s2 + $0x1c8] sm:$0xff] %v984
    %1049 = vst [vmem:[%s2 + $0x1d0] sm:$0xff] %v985
    %1050 = vst [vmem:[%s2 + $0x1d8] sm:$0xff] %v986
    %1051 = vst [vmem:[%s2 + $0x1e0] sm:$0xff] %v987
    %1052 = vst [vmem:[%s2 + $0x1e8] sm:$0xff] %v988
    %1053 = vst [vmem:[%s2 + $0x1f0] sm:$0xff] %v989
    %1054 = vst [vmem:[%s2 + $0x1f8] sm:$0xff] %v990
    %v1055 = vadd.f32 %v927, %v928
    %v1056 = vadd.f32 %v1055, %v929
    %v1057 = vadd.f32 %v1056, %v930
    %v1058 = vadd.f32 %v1057, %v931
    %v1059 = vadd.f32 %v1058, %v932
    %v1060 = vadd.f32 %v1059, %v933
    %v1061 = vadd.f32 %v1060, %v934
    %v1062 = vadd.f32 %v1061, %v935
    %v1063 = vadd.f32 %v1062, %v936
    %v1064 = vadd.f32 %v1063, %v937
    %v1065 = vadd.f32 %v1064, %v938
    %v1066 = vadd.f32 %v1065, %v939
    %v1067 = vadd.f32 %v1066, %v940
    %v1068 = vadd.f32 %v1067, %v941
    %v1069 = vadd.f32 %v1068, %v942
    %v1070 = vadd.f32 %v1069, %v943
    %v1071 = vadd.f32 %v1070, %v944
    %v1072 = vadd.f32 %v1071, %v945
    %v1073 = vadd.f32 %v1072, %v946
    %v1074 = vadd.f32 %v1073, %v947
    %v1075 = vadd.f32 %v1074, %v948
    %v1076 = vadd.f32 %v1075, %v949
    %v1077 = vadd.f32 %v1076, %v950
    %v1078 = vadd.f32 %v1077, %v951
    %v1079 = vadd.f32 %v1078, %v952
    %v1080 = vadd.f32 %v1079, %v953
    %v1081 = vadd.f32 %v1080, %v954
    %v1082 = vadd.f32 %v1081, %v955
    %v1083 = vadd.f32 %v1082, %v956
    %v1084 = vadd.f32 %v1083, %v957
    %v1085 = vadd.f32 %v1084, %v958
    %v1086 = vadd.f32 %v1085, %v959
    %v1087 = vadd.f32 %v1086, %v960
    %v1088 = vadd.f32 %v1087, %v961
    %v1089 = vadd.f32 %v1088, %v962
    %v1090 = vadd.f32 %v1089, %v963
    %v1091 = vadd.f32 %v1090, %v964
    %v1092 = vadd.f32 %v1091, %v965
    %v1093 = vadd.f32 %v1092, %v966
    %v1094 = vadd.f32 %v1093, %v967
    %v1095 = vadd.f32 %v1094, %v968
    %v1096 = vadd.f32 %v1095, %v969
    %v1097 = vadd.f32 %v1096, %v970
    %v1098 = vadd.f32 %v1097, %v971
    %v1099 = vadd.f32 %v1098, %v972
    %v1100 = vadd.f32 %v1099, %v973
    %v1101 = vadd.f32 %v1100, %v974
    %v1102 = vadd.f32 %v1101, %v975
    %v1103 = vadd.f32 %v1102, %v976
    %v1104 = vadd.f32 %v1103, %v977
    %v1105 = vadd.f32 %v1104, %v978
    %v1106 = vadd.f32 %v1105, %v979
    %v1107 = vadd.f32 %v1106, %v980
    %v1108 = vadd.f32 %v1107, %v981
    %v1109 = vadd.f32 %v1108, %v982
    %v1110 = vadd.f32 %v1109, %v983
    %v1111 = vadd.f32 %v1110, %v984
    %v1112 = vadd.f32 %v1111, %v985
    %v1113 = vadd.f32 %v1112, %v986
    %v1114 = vadd.f32 %v1113, %v987
    %v1115 = vadd.f32 %v1114, %v988
    %v1116 = vadd.f32 %v1115, %v989
    %v1117 = vadd.f32 %v1116, %v990
    %v1118 = vrot.slane %v1117, 4
    %v1119 = vadd.f32 %v1117, %v1118
    %v1120 = vrot.slane %v1119, 2
    %v1121 = vadd.f32 %v1119, %v1120
    %v1122 = vrot.slane %v1121, 1
    %v1123 = vadd.f32 %v1121, %v1122
    %v1124 = vmul.f32 %v927, %v927
    %v1125 = vmul.f32 %v928, %v928
    %v1126 = vmul.f32 %v929, %v929
    %v1127 = vmul.f32 %v930, %v930
    %v1128 = vmul.f32 %v931, %v931
    %v1129 = vmul.f32 %v932, %v932
    %v1130 = vmul.f32 %v933, %v933
    %v1131 = vmul.f32 %v934, %v934
    %v1132 = vmul.f32 %v935, %v935
    %v1133 = vmul.f32 %v936, %v936
    %v1134 = vmul.f32 %v937, %v937
    %v1135 = vmul.f32 %v938, %v938
    %v1136 = vmul.f32 %v939, %v939
    %v1137 = vmul.f32 %v940, %v940
    %v1138 = vmul.f32 %v941, %v941
    %v1139 = vmul.f32 %v942, %v942
    %v1140 = vmul.f32 %v943, %v943
    %v1141 = vmul.f32 %v944, %v944
    %v1142 = vmul.f32 %v945, %v945
    %v1143 = vmul.f32 %v946, %v946
    %v1144 = vmul.f32 %v947, %v947
    %v1145 = vmul.f32 %v948, %v948
    %v1146 = vmul.f32 %v949, %v949
    %v1147 = vmul.f32 %v950, %v950
    %v1148 = vmul.f32 %v951, %v951
    %v1149 = vmul.f32 %v952, %v952
    %v1150 = vmul.f32 %v953, %v953
    %v1151 = vmul.f32 %v954, %v954
    %v1152 = vmul.f32 %v955, %v955
    %v1153 = vmul.f32 %v956, %v956
    %v1154 = vmul.f32 %v957, %v957
    %v1155 = vmul.f32 %v958, %v958
    %v1156 = vmul.f32 %v959, %v959
    %v1157 = vmul.f32 %v960, %v960
    %v1158 = vmul.f32 %v961, %v961
    %v1159 = vmul.f32 %v962, %v962
    %v1160 = vmul.f32 %v963, %v963
    %v1161 = vmul.f32 %v964, %v964
    %v1162 = vmul.f32 %v965, %v965
    %v1163 = vmul.f32 %v966, %v966
    %v1164 = vmul.f32 %v967, %v967
    %v1165 = vmul.f32 %v968, %v968
    %v1166 = vmul.f32 %v969, %v969
    %v1167 = vmul.f32 %v970, %v970
    %v1168 = vmul.f32 %v971, %v971
    %v1169 = vmul.f32 %v972, %v972
    %v1170 = vmul.f32 %v973, %v973
    %v1171 = vmul.f32 %v974, %v974
    %v1172 = vmul.f32 %v975, %v975
    %v1173 = vmul.f32 %v976, %v976
    %v1174 = vmul.f32 %v977, %v977
    %v1175 = vmul.f32 %v978, %v978
    %v1176 = vmul.f32 %v979, %v979
    %v1177 = vmul.f32 %v980, %v980
    %v1178 = vmul.f32 %v981, %v981
    %v1179 = vmul.f32 %v982, %v982
    %v1180 = vmul.f32 %v983, %v983
    %v1181 = vmul.f32 %v984, %v984
    %v1182 = vmul.f32 %v985, %v985
    %v1183 = vmul.f32 %v986, %v986
    %v1184 = vmul.f32 %v987, %v987
    %v1185 = vmul.f32 %v988, %v988
    %v1186 = vmul.f32 %v989, %v989
    %v1187 = vmul.f32 %v990, %v990
    %v1188 = vadd.f32 %v1124, %v1125
    %v1189 = vadd.f32 %v1188, %v1126
    %v1190 = vadd.f32 %v1189, %v1127
    %v1191 = vadd.f32 %v1190, %v1128
    %v1192 = vadd.f32 %v1191, %v1129
    %v1193 = vadd.f32 %v1192, %v1130
    %v1194 = vadd.f32 %v1193, %v1131
    %v1195 = vadd.f32 %v1194, %v1132
    %v1196 = vadd.f32 %v1195, %v1133
    %v1197 = vadd.f32 %v1196, %v1134
    %v1198 = vadd.f32 %v1197, %v1135
    %v1199 = vadd.f32 %v1198, %v1136
    %v1200 = vadd.f32 %v1199, %v1137
    %v1201 = vadd.f32 %v1200, %v1138
    %v1202 = vadd.f32 %v1201, %v1139
    %v1203 = vadd.f32 %v1202, %v1140
    %v1204 = vadd.f32 %v1203, %v1141
    %v1205 = vadd.f32 %v1204, %v1142
    %v1206 = vadd.f32 %v1205, %v1143
    %v1207 = vadd.f32 %v1206, %v1144
    %v1208 = vadd.f32 %v1207, %v1145
    %v1209 = vadd.f32 %v1208, %v1146
    %v1210 = vadd.f32 %v1209, %v1147
    %v1211 = vadd.f32 %v1210, %v1148
    %v1212 = vadd.f32 %v1211, %v1149
    %v1213 = vadd.f32 %v1212, %v1150
    %v1214 = vadd.f32 %v1213, %v1151
    %v1215 = vadd.f32 %v1214, %v1152
    %v1216 = vadd.f32 %v1215, %v1153
    %v1217 = vadd.f32 %v1216, %v1154
    %v1218 = vadd.f32 %v1217, %v1155
    %v1219 = vadd.f32 %v1218, %v1156
    %v1220 = vadd.f32 %v1219, %v1157
    %v1221 = vadd.f32 %v1220, %v1158
    %v1222 = vadd.f32 %v1221, %v1159
    %v1223 = vadd.f32 %v1222, %v1160
    %v1224 = vadd.f32 %v1223, %v1161
    %v1225 = vadd.f32 %v1224, %v1162
    %v1226 = vadd.f32 %v1225, %v1163
    %v1227 = vadd.f32 %v1226, %v1164
    %v1228 = vadd.f32 %v1227, %v1165
    %v1229 = vadd.f32 %v1228, %v1166
    %v1230 = vadd.f32 %v1229, %v1167
    %v1231 = vadd.f32 %v1230, %v1168
    %v1232 = vadd.f32 %v1231, %v1169
    %v1233 = vadd.f32 %v1232, %v1170
    %v1234 = vadd.f32 %v1233, %v1171
    %v1235 = vadd.f32 %v1234, %v1172
    %v1236 = vadd.f32 %v1235, %v1173
    %v1237 = vadd.f32 %v1236, %v1174
    %v1238 = vadd.f32 %v1237, %v1175
    %v1239 = vadd.f32 %v1238, %v1176
    %v1240 = vadd.f32 %v1239, %v1177
    %v1241 = vadd.f32 %v1240, %v1178
    %v1242 = vadd.f32 %v1241, %v1179
    %v1243 = vadd.f32 %v1242, %v1180
    %v1244 = vadd.f32 %v1243, %v1181
    %v1245 = vadd.f32 %v1244, %v1182
    %v1246 = vadd.f32 %v1245, %v1183
    %v1247 = vadd.f32 %v1246, %v1184
    %v1248 = vadd.f32 %v1247, %v1185
    %v1249 = vadd.f32 %v1248, %v1186
    %v1250 = vadd.f32 %v1249, %v1187
    %v1251 = vrot.slane %v1250, 4
    %v1252 = vadd.f32 %v1250, %v1251
    %v1253 = vrot.slane %v1252, 2
    %v1254 = vadd.f32 %v1252, %v1253
    %v1255 = vrot.slane %v1254, 1
    %v1256 = vadd.f32 %v1254, %v1255
    %vm1257 = vcmask 1040384
    %v1258 = vsel %vm1257, %v1123, %v1256
    %1259 = vst [vmem:[%s3] sm:$0x3] %v1258
  $region17: #{conv2d_batchnorm_relu.2} parent=0 // pred_fallthru
    _
  // Predicated region
  $region18: #{conv2d_batchnorm_relu.2} parent=0 // pred_check
    _
  $region19: #{conv2d_batchnorm_relu.2} parent=0 // pred_check_branch
    %1261 = sbr.rel (0) target = $region21
  $region20: #{conv2d_batchnorm_relu.2} parent=0 // pred_region
    _
  $region21: #{conv2d_batchnorm_relu.2} parent=0 // pred_fallthru
    _
  // Predicated region
  $region22: #{conv2d_batchnorm_relu.2} parent=0 // pred_check
    _
  $region23: #{conv2d_batchnorm_relu.2} parent=0 // pred_check_branch
    %1263 = sbr.rel (0) target = $region25
  $region24: #{conv2d_batchnorm_relu.2} parent=0 // pred_region
    _
  $region25: #{conv2d_batchnorm_relu.2} parent=0 // pred_fallthru
    _
  // Predicated region
  $region26: #{conv2d_batchnorm_relu.2} parent=0 // pred_check
    _
  $region27: #{conv2d_batchnorm_relu.2} parent=0 // pred_check_branch
    %1265 = sbr.rel (0) target = $region29
  $region28: #{conv2d_batchnorm_relu.2} parent=0 // pred_region
    _
  $region29: #{conv2d_batchnorm_relu.2} parent=0 // pred_fallthru
    _
  // Predicated region
  $region30: #{conv2d_batchnorm_relu.2} parent=0 // pred_check
    _
  $region31: #{conv2d_batchnorm_relu.2} parent=0 // pred_check_branch
    %1267 = sbr.rel (0) target = $region33
  $region32: #{conv2d_batchnorm_relu.2} parent=0 // pred_region
    _
  $region33: #{conv2d_batchnorm_relu.2} parent=0 // pred_fallthru
    _

</llo_original>
